<compile_context>
chip_gen: v7x
topology: tpu7x:2x2x1
jax: 0.10.0
libtpu: 0.0.40
codegen_flags: <defaults>
</compile_context>

<pallas_src>
import math

import jax
import jax.numpy as jnp
from jax.experimental import pallas as pl
from jax.experimental.pallas import tpu as pltpu

# ---------------------------------------------------------------- dimensions
B = 2      # batch
S = 8      # seq_len
D = 32     # d_model
K = 4      # num_clusters
C = 5      # num_classes
VOCAB = 50

_EPS = 1e-6

# ------------------------------------------------ packed-output lane layout
# single (B*S, 128) f32 slab
ADJ_OFF = 0            # lanes [0, S)      rows 0..B*S-1 : adjacency (B,S,S)
ASN_OFF = S            # lanes [S, S+K)    rows 0..B*S-1 : cluster assignment (B,S,K)
CW_OFF = 16            # lane  CW_OFF      rows 0..B*K-1 : cluster weights (column)
LP_OFF = 24            # lanes [24, 24+C)  rows 0..B-1   : log-softmax logits
LS_OFF = 32            # lanes [32, 35)    row 0         : KLD / link / entropy losses
OUT_LANES = 128


# ------------------------------------------------------------------- kernel
def deep_journey_kernel(code_ref, itv_ref, pad_ref, mask_ref, prior_ref,
                        table_ref, small_ref, wqk_ref, wv_ref, wa_ref,
                        wg_ref, wc_ref, out_ref):
    f32 = jnp.float32
    BS = B * S

    # ---- packed small constants -------------------------------------------
    w_t = small_ref[0:1, :]           # (1, D) time-encoder weight
    b_t = small_ref[1:2, :]           # (1, D) time-encoder bias
    u_g = small_ref[2:3, :]           # (1, D) global-pool attention vector
    b_c = small_ref[3:4, 0:C]         # (1, C) classifier bias

    # ---- embedding (in-kernel one-hot gather) + time encoding --------------
    code = code_ref[...]                                              # (BS,1) int32
    vocab_iota = jax.lax.broadcasted_iota(jnp.int32, (BS, VOCAB), 1)
    onehot = (code == vocab_iota).astype(f32)                         # (BS, VOCAB)
    x_emb = jnp.dot(onehot, table_ref[...], preferred_element_type=f32)   # (BS, D)

    itv = itv_ref[...]                                                # (BS, 1)
    pad = pad_ref[...]                                                # (BS, 1)
    x2 = x_emb + jnp.tanh(itv * w_t + b_t)                            # seq_emds (BS, D)
    x3 = x2.reshape(B, S, D)

    # ---- structure learner --------------------------------------------------
    qk = jnp.dot(x2, wqk_ref[...], preferred_element_type=f32)        # (BS, 2D) fused Wq|Wk
    q3 = qk[:, 0:D].reshape(B, S, D)
    k3 = qk[:, D:2 * D].reshape(B, S, D)

    scores = jnp.einsum('bqd,bkd->bqk', q3, k3,
                        preferred_element_type=f32) * (1.0 / math.sqrt(D))
    mask = mask_ref[...]                                              # causal*pad*pad^T
    adj = jax.nn.sigmoid(scores) * mask                               # (B,S,S)

    prior = prior_ref[...]
    p = adj
    kld_map = (p * jnp.log((p + _EPS) / (prior + _EPS))
               + (1.0 - p) * jnp.log((1.0 - p + _EPS) / (1.0 - prior + _EPS))) * mask
    kld_mean = jnp.sum(kld_map.reshape(BS, S), keepdims=True) * (1.0 / (B * S * S))

    # GCN-style node update: X + relu((A X) Wv)
    agg = jnp.einsum('bij,bjd->bid', adj, x3, preferred_element_type=f32)
    node2 = x2 + jnp.maximum(
        jnp.dot(agg.reshape(BS, D), wv_ref[...], preferred_element_type=f32), 0.0)
    node3 = node2.reshape(B, S, D)

    # ---- graph pooler (DiffPool) --------------------------------------------
    s_logits = jnp.dot(node2, wa_ref[...], preferred_element_type=f32)    # (BS, K)
    s_logits = s_logits - jnp.max(s_logits, axis=-1, keepdims=True)
    s_exp = jnp.exp(s_logits)
    s2 = (s_exp / jnp.sum(s_exp, axis=-1, keepdims=True)) * pad           # (BS, K)
    s3 = s2.reshape(B, S, K)

    embed_pool = jnp.einsum('bsk,bsd->bkd', s3, node3,
                            preferred_element_type=f32)                   # (B,K,D)
    sst = jnp.einsum('bik,bjk->bij', s3, s3, preferred_element_type=f32)  # (B,S,S)
    link_mean = jnp.sum(((adj - sst) ** 2).reshape(BS, S),
                        keepdims=True) * (1.0 / (B * S * S))
    ent_mean = jnp.sum(-s2 * jnp.log(s2 + _EPS),
                       keepdims=True) * (1.0 / (B * S * K))

    # ---- global pooler (attention over clusters) ----------------------------
    ep2 = embed_pool.reshape(B * K, D)
    h2 = jnp.tanh(jnp.dot(ep2, wg_ref[...], preferred_element_type=f32))  # (BK, D)
    att = jnp.sum(h2 * u_g, axis=-1, keepdims=True)                       # (BK, 1)
    att3 = att.reshape(B, K, 1)
    att3 = att3 - jnp.max(att3, axis=1, keepdims=True)
    w_exp = jnp.exp(att3)
    cw3 = w_exp / jnp.sum(w_exp, axis=1, keepdims=True)                   # (B, K, 1)
    graph_embed = jnp.sum(cw3 * embed_pool, axis=1)                       # (B, D)

    # ---- classifier: linear + log_softmax -----------------------------------
    logits = jnp.dot(graph_embed, wc_ref[...], preferred_element_type=f32) + b_c
    logits = logits - jnp.max(logits, axis=-1, keepdims=True)
    log_probs = logits - jnp.log(jnp.sum(jnp.exp(logits), axis=-1, keepdims=True))

    # ---- pack everything into one lane-dense output slab --------------------
    out_ref[...] = jnp.zeros((BS, OUT_LANES), f32)
    out_ref[:, ADJ_OFF:ADJ_OFF + S] = adj.reshape(BS, S)
    out_ref[:, ASN_OFF:ASN_OFF + K] = s2
    out_ref[0:B * K, CW_OFF:CW_OFF + 1] = cw3.reshape(B * K, 1)
    out_ref[0:B, LP_OFF:LP_OFF + C] = log_probs
    out_ref[0:1, LS_OFF + 0:LS_OFF + 1] = kld_mean
    out_ref[0:1, LS_OFF + 1:LS_OFF + 2] = link_mean
    out_ref[0:1, LS_OFF + 2:LS_OFF + 3] = ent_mean


# ------------------------------------------------------------------ wrapper
def deep_journey_forward(params, code_ints, pad_masks, causal_masks,
                         enc_intervals, prior_matrices):
    f32 = jnp.float32
    code = code_ints.astype(jnp.int32).reshape(B * S, 1)
    itv = enc_intervals.astype(f32).reshape(B * S, 1)
    pad = pad_masks.astype(f32)
    pad_col = pad.reshape(B * S, 1)
    # precompute the pad/causal mask outer product in glue (fuses into XLA prep)
    mask = causal_masks.astype(f32) * pad[:, :, None] * pad[:, None, :]
    prior = prior_matrices.astype(f32)

    def full(shape):
        return pl.BlockSpec(shape, lambda i: (0,) * len(shape))

    in_specs = [
        full((B * S, 1)),        # code ints
        full((B * S, 1)),        # intervals
        full((B * S, 1)),        # pad mask (column)
        full((B, S, S)),         # combined causal*pad mask
        full((B, S, S)),         # prior matrices
        full((VOCAB, D)),        # embedding table
        full((4, D)),            # packed small params (w_t, b_t, u_g, bc)
        full((D, 2 * D)),        # fused Wq | Wk
        full((D, D)),            # Wv
        full((D, K)),            # Wa (cluster assignment)
        full((D, D)),            # Wg
        full((D, C)),            # Wc
    ]
    out_specs = full((B * S, OUT_LANES))

    packed = pl.pallas_call(
        deep_journey_kernel,
        out_shape=jax.ShapeDtypeStruct((B * S, OUT_LANES), f32),
        grid_spec=pltpu.PrefetchScalarGridSpec(
            num_scalar_prefetch=0,
            grid=(1,),                      # single program: whole batch at once
            in_specs=in_specs,
            out_specs=out_specs,
        ),
        compiler_params=pltpu.CompilerParams(
            dimension_semantics=("arbitrary",)),
    )(code, itv, pad_col, mask, prior,
      params["embed_table"], params["small"], params["Wqk"],
      params["Wv"], params["Wa"], params["Wg"], params["Wc"])

    # unpack the lane-dense slab with cheap slices
    adj = packed[:, ADJ_OFF:ADJ_OFF + S].reshape(B, S, S)
    cluster_assign = packed[:, ASN_OFF:ASN_OFF + K].reshape(B, S, K)
    cluster_weights = packed[0:B * K, CW_OFF].reshape(B, K)
    logits = packed[0:B, LP_OFF:LP_OFF + C]
    KLD_loss = packed[0, LS_OFF + 0]
    link_loss = packed[0, LS_OFF + 1]
    ent_loss = packed[0, LS_OFF + 2]

    return (logits, adj, cluster_assign, cluster_weights,
            KLD_loss, link_loss, ent_loss)


# ------------------------------------------------------------ param factory
def init_params(key):
    keys = jax.random.split(key, 10)
    scale = 0.1
    nrm = lambda k, shape: scale * jax.random.normal(k, shape, jnp.float32)

    w_t = nrm(keys[1], (1, D))
    b_t = nrm(keys[2], (1, D))
    Wq = nrm(keys[3], (D, D))
    Wk = nrm(keys[4], (D, D))
    u_g = nrm(keys[8], (D, 1))
    b_c = jnp.zeros((1, C), jnp.float32)

    small = jnp.zeros((4, D), jnp.float32)
    small = small.at[0, :].set(w_t[0])
    small = small.at[1, :].set(b_t[0])
    small = small.at[2, :].set(u_g[:, 0])
    small = small.at[3, 0:C].set(b_c[0])

    return {
        "embed_table": nrm(keys[0], (VOCAB, D)),
        "small": small,
        "Wqk": jnp.concatenate([Wq, Wk], axis=1),   # (D, 2D)
        "Wv": nrm(keys[5], (D, D)),
        "Wa": nrm(keys[6], (D, K)),
        "Wg": nrm(keys[7], (D, D)),
        "Wc": nrm(keys[9], (D, C)),
    }


# ---------------------------------------------------------------------- main
if __name__ == "__main__":
    key = jax.random.PRNGKey(0)
    pkey, k1, k2, k3 = jax.random.split(key, 4)
    params = init_params(pkey)

    code_ints = jax.random.randint(k1, (B, S), 0, VOCAB)                     # (B,S)
    lengths = jnp.array([S, S - 2])
    pad_masks = (jnp.arange(S)[None, :] < lengths[:, None]).astype(jnp.float32)   # (B,S)
    causal_masks = jnp.broadcast_to(
        jnp.tril(jnp.ones((S, S), jnp.float32)), (B, S, S))                  # (B,S,S)
    enc_intervals = jax.random.uniform(k2, (B, S), jnp.float32)              # (B,S)
    prior_matrices = jax.random.uniform(k3, (B, S, S), jnp.float32) * causal_masks

    outs = deep_journey_forward(params, code_ints, pad_masks, causal_masks,
                                enc_intervals, prior_matrices)
    outs = jax.block_until_ready(outs)

    (logits, adj, cluster_assign, cluster_weights,
     KLD_loss, link_loss, ent_loss) = outs
    assert logits.shape == (B, C)
    assert adj.shape == (B, S, S)
    assert cluster_assign.shape == (B, S, K)
    assert cluster_weights.shape == (B, K)
    assert jnp.all(jnp.isfinite(logits))
    assert jnp.all(jnp.isfinite(jnp.stack([KLD_loss, link_loss, ent_loss])))
    print("KERNEL_OK")
</pallas_src>

<mosaic_0001>
module attributes {stable_mosaic.version = 11 : i64} {
  func.func @deep_journey_kernel(%arg0: i32, %arg1: memref<16x1xi32, #tpu.memory_space<vmem>>, %arg2: memref<16x1xf32, #tpu.memory_space<vmem>>, %arg3: memref<16x1xf32, #tpu.memory_space<vmem>>, %arg4: memref<2x8x8xf32, #tpu.memory_space<vmem>>, %arg5: memref<2x8x8xf32, #tpu.memory_space<vmem>>, %arg6: memref<50x32xf32, #tpu.memory_space<vmem>>, %arg7: memref<4x32xf32, #tpu.memory_space<vmem>>, %arg8: memref<32x64xf32, #tpu.memory_space<vmem>>, %arg9: memref<32x32xf32, #tpu.memory_space<vmem>>, %arg10: memref<32x4xf32, #tpu.memory_space<vmem>>, %arg11: memref<32x32xf32, #tpu.memory_space<vmem>>, %arg12: memref<32x5xf32, #tpu.memory_space<vmem>>, %arg13: memref<16x128xf32, #tpu.memory_space<vmem>>) attributes {dimension_semantics = [#tpu.dimension_semantics<arbitrary>], iteration_bounds = array<i64: 1>, scalar_prefetch = 0 : i64, scratch_operands = 0 : i64, tpu.core_type = #tpu.core_type<tc>, window_params = [{pipeline_mode = #tpu.pipeline_mode<synchronous>, transform_indices = @transform_0, window_bounds = array<i64: 16, 1>}, {pipeline_mode = #tpu.pipeline_mode<synchronous>, transform_indices = @transform_1, window_bounds = array<i64: 16, 1>}, {pipeline_mode = #tpu.pipeline_mode<synchronous>, transform_indices = @transform_2, window_bounds = array<i64: 16, 1>}, {pipeline_mode = #tpu.pipeline_mode<synchronous>, transform_indices = @transform_3, window_bounds = array<i64: 2, 8, 8>}, {pipeline_mode = #tpu.pipeline_mode<synchronous>, transform_indices = @transform_4, window_bounds = array<i64: 2, 8, 8>}, {pipeline_mode = #tpu.pipeline_mode<synchronous>, transform_indices = @transform_5, window_bounds = array<i64: 50, 32>}, {pipeline_mode = #tpu.pipeline_mode<synchronous>, transform_indices = @transform_6, window_bounds = array<i64: 4, 32>}, {pipeline_mode = #tpu.pipeline_mode<synchronous>, transform_indices = @transform_7, window_bounds = array<i64: 32, 64>}, {pipeline_mode = #tpu.pipeline_mode<synchronous>, transform_indices = @transform_8, window_bounds = array<i64: 32, 32>}, {pipeline_mode = #tpu.pipeline_mode<synchronous>, transform_indices = @transform_9, window_bounds = array<i64: 32, 4>}, {pipeline_mode = #tpu.pipeline_mode<synchronous>, transform_indices = @transform_10, window_bounds = array<i64: 32, 32>}, {pipeline_mode = #tpu.pipeline_mode<synchronous>, transform_indices = @transform_11, window_bounds = array<i64: 32, 5>}, {pipeline_mode = #tpu.pipeline_mode<synchronous>, transform_indices = @transform_12, window_bounds = array<i64: 16, 128>}]} {
    %c0 = arith.constant 0 : index
    %c0_0 = arith.constant 0 : index
    %0 = vector.load %arg7[%c0, %c0_0] : memref<4x32xf32, #tpu.memory_space<vmem>>, vector<1x32xf32>
    %c1 = arith.constant 1 : index
    %c0_1 = arith.constant 0 : index
    %1 = vector.load %arg7[%c1, %c0_1] : memref<4x32xf32, #tpu.memory_space<vmem>>, vector<1x32xf32>
    %c2 = arith.constant 2 : index
    %c0_2 = arith.constant 0 : index
    %2 = vector.load %arg7[%c2, %c0_2] : memref<4x32xf32, #tpu.memory_space<vmem>>, vector<1x32xf32>
    %c3 = arith.constant 3 : index
    %c0_3 = arith.constant 0 : index
    %3 = vector.load %arg7[%c3, %c0_3] : memref<4x32xf32, #tpu.memory_space<vmem>>, vector<1x5xf32>
    %c0_4 = arith.constant 0 : index
    %c0_5 = arith.constant 0 : index
    %4 = vector.load %arg1[%c0_4, %c0_5] : memref<16x1xi32, #tpu.memory_space<vmem>>, vector<16x1xi32>
    %5 = tpu.iota {dimensions = array<i32: 1>} : vector<16x50xi32>
    %6 = vector.broadcast %4 : vector<16x1xi32> to vector<16x50xi32>
    %7 = arith.cmpi eq, %6, %5 : vector<16x50xi32>
    %8 = arith.extui %7 : vector<16x50xi1> to vector<16x50xi32>
    %9 = arith.sitofp %8 : vector<16x50xi32> to vector<16x50xf32>
    %c0_6 = arith.constant 0 : index
    %c0_7 = arith.constant 0 : index
    %10 = vector.load %arg6[%c0_6, %c0_7] : memref<50x32xf32, #tpu.memory_space<vmem>>, vector<50x32xf32>
    %cst = arith.constant dense<0.000000e+00> : vector<16x32xf32>
    %11 = tpu.matmul %9, %10, %cst {dimension_numbers = #tpu.dot_dimension_numbers<[1], [0], [0], [1], [0, 0, 1, 1], [], []>} : vector<16x50xf32>, vector<50x32xf32>, vector<16x32xf32> -> vector<16x32xf32>
    %c0_8 = arith.constant 0 : index
    %c0_9 = arith.constant 0 : index
    %12 = vector.load %arg2[%c0_8, %c0_9] : memref<16x1xf32, #tpu.memory_space<vmem>>, vector<16x1xf32>
    %c0_10 = arith.constant 0 : index
    %c0_11 = arith.constant 0 : index
    %13 = vector.load %arg3[%c0_10, %c0_11] : memref<16x1xf32, #tpu.memory_space<vmem>>, vector<16x1xf32>
    %14 = vector.broadcast %12 : vector<16x1xf32> to vector<16x32xf32>
    %15 = vector.broadcast %0 : vector<1x32xf32> to vector<16x32xf32>
    %16 = arith.mulf %14, %15 : vector<16x32xf32>
    %17 = vector.broadcast %1 : vector<1x32xf32> to vector<16x32xf32>
    %18 = arith.addf %16, %17 : vector<16x32xf32>
    %19 = math.tanh %18 : vector<16x32xf32>
    %20 = arith.addf %11, %19 : vector<16x32xf32>
    %21 = vector.shape_cast %20 : vector<16x32xf32> to vector<2x8x32xf32>
    %c0_12 = arith.constant 0 : index
    %c0_13 = arith.constant 0 : index
    %22 = vector.load %arg8[%c0_12, %c0_13] : memref<32x64xf32, #tpu.memory_space<vmem>>, vector<32x64xf32>
    %cst_14 = arith.constant dense<0.000000e+00> : vector<16x64xf32>
    %23 = tpu.matmul %20, %22, %cst_14 {dimension_numbers = #tpu.dot_dimension_numbers<[1], [0], [0], [1], [0, 0, 1, 1], [], []>} : vector<16x32xf32>, vector<32x64xf32>, vector<16x64xf32> -> vector<16x64xf32>
    %24 = vector.extract_strided_slice %23 {offsets = [0, 0], sizes = [16, 32], strides = [1, 1]} : vector<16x64xf32> to vector<16x32xf32>
    %25 = vector.shape_cast %24 : vector<16x32xf32> to vector<2x8x32xf32>
    %26 = vector.extract_strided_slice %23 {offsets = [0, 32], sizes = [16, 32], strides = [1, 1]} : vector<16x64xf32> to vector<16x32xf32>
    %27 = vector.shape_cast %26 : vector<16x32xf32> to vector<2x8x32xf32>
    "tpu.trace_start"() <{level = 10 : i32, message = "bqd,bkd->bqk"}> : () -> ()
    %cst_15 = arith.constant dense<0.000000e+00> : vector<2x8x8xf32>
    %28 = tpu.matmul %25, %27, %cst_15 {dimension_numbers = #tpu.dot_dimension_numbers<[2], [2], [1], [1], [0, 0, 0, 1, 1, 1], [0], [0]>} : vector<2x8x32xf32>, vector<2x8x32xf32>, vector<2x8x8xf32> -> vector<2x8x8xf32>
    "tpu.trace_stop"() : () -> ()
    %cst_16 = arith.constant 0.176776692 : f32
    %29 = vector.broadcast %cst_16 : f32 to vector<2x8x8xf32>
    %30 = arith.mulf %28, %29 : vector<2x8x8xf32>
    %c0_17 = arith.constant 0 : index
    %c0_18 = arith.constant 0 : index
    %c0_19 = arith.constant 0 : index
    %31 = vector.load %arg4[%c0_17, %c0_18, %c0_19] : memref<2x8x8xf32, #tpu.memory_space<vmem>>, vector<2x8x8xf32>
    %32 = arith.negf %30 : vector<2x8x8xf32>
    %33 = math.exp %32 : vector<2x8x8xf32>
    %cst_20 = arith.constant 1.000000e+00 : f32
    %34 = vector.broadcast %cst_20 : f32 to vector<2x8x8xf32>
    %35 = arith.addf %34, %33 : vector<2x8x8xf32>
    %36 = arith.divf %34, %35 : vector<2x8x8xf32>
    %37 = arith.mulf %36, %31 : vector<2x8x8xf32>
    %c0_21 = arith.constant 0 : index
    %c0_22 = arith.constant 0 : index
    %c0_23 = arith.constant 0 : index
    %38 = vector.load %arg5[%c0_21, %c0_22, %c0_23] : memref<2x8x8xf32, #tpu.memory_space<vmem>>, vector<2x8x8xf32>
    %cst_24 = arith.constant 9.99999997E-7 : f32
    %39 = vector.broadcast %cst_24 : f32 to vector<2x8x8xf32>
    %40 = arith.addf %37, %39 : vector<2x8x8xf32>
    %cst_25 = arith.constant 9.99999997E-7 : f32
    %41 = vector.broadcast %cst_25 : f32 to vector<2x8x8xf32>
    %42 = arith.addf %38, %41 : vector<2x8x8xf32>
    %43 = arith.divf %40, %42 : vector<2x8x8xf32>
    %44 = math.log %43 : vector<2x8x8xf32>
    %45 = arith.mulf %37, %44 : vector<2x8x8xf32>
    %cst_26 = arith.constant 1.000000e+00 : f32
    %46 = vector.broadcast %cst_26 : f32 to vector<2x8x8xf32>
    %47 = arith.subf %46, %37 : vector<2x8x8xf32>
    %cst_27 = arith.constant 1.000000e+00 : f32
    %48 = vector.broadcast %cst_27 : f32 to vector<2x8x8xf32>
    %49 = arith.subf %48, %37 : vector<2x8x8xf32>
    %cst_28 = arith.constant 9.99999997E-7 : f32
    %50 = vector.broadcast %cst_28 : f32 to vector<2x8x8xf32>
    %51 = arith.addf %49, %50 : vector<2x8x8xf32>
    %cst_29 = arith.constant 1.000000e+00 : f32
    %52 = vector.broadcast %cst_29 : f32 to vector<2x8x8xf32>
    %53 = arith.subf %52, %38 : vector<2x8x8xf32>
    %cst_30 = arith.constant 9.99999997E-7 : f32
    %54 = vector.broadcast %cst_30 : f32 to vector<2x8x8xf32>
    %55 = arith.addf %53, %54 : vector<2x8x8xf32>
    %56 = arith.divf %51, %55 : vector<2x8x8xf32>
    %57 = math.log %56 : vector<2x8x8xf32>
    %58 = arith.mulf %47, %57 : vector<2x8x8xf32>
    %59 = arith.addf %45, %58 : vector<2x8x8xf32>
    %60 = arith.mulf %59, %31 : vector<2x8x8xf32>
    %61 = vector.shape_cast %60 : vector<2x8x8xf32> to vector<16x8xf32>
    %62 = vector.shape_cast %61 : vector<16x8xf32> to vector<1x16x8xf32>
    %cst_31 = arith.constant dense<0.000000e+00> : vector<1xf32>
    %63 = vector.multi_reduction <add>, %62, %cst_31 [1, 2] : vector<1x16x8xf32> to vector<1xf32>
    %64 = vector.shape_cast %63 : vector<1xf32> to vector<1x1x1xf32>
    %65 = vector.extract %64[0, 0, 0] : f32 from vector<1x1x1xf32>
    %66 = vector.broadcast %65 : f32 to vector<1x1xf32>
    %cst_32 = arith.constant 7.812500e-03 : f32
    %67 = vector.broadcast %cst_32 : f32 to vector<1x1xf32>
    %68 = arith.mulf %66, %67 : vector<1x1xf32>
    "tpu.trace_start"() <{level = 10 : i32, message = "bij,bjd->bid"}> : () -> ()
    %cst_33 = arith.constant dense<0.000000e+00> : vector<2x8x32xf32>
    %69 = tpu.matmul %37, %21, %cst_33 {dimension_numbers = #tpu.dot_dimension_numbers<[2], [1], [1], [2], [0, 0, 0, 1, 1, 2], [0], [0]>} : vector<2x8x8xf32>, vector<2x8x32xf32>, vector<2x8x32xf32> -> vector<2x8x32xf32>
    "tpu.trace_stop"() : () -> ()
    %70 = vector.shape_cast %69 : vector<2x8x32xf32> to vector<16x32xf32>
    %c0_34 = arith.constant 0 : index
    %c0_35 = arith.constant 0 : index
    %71 = vector.load %arg9[%c0_34, %c0_35] : memref<32x32xf32, #tpu.memory_space<vmem>>, vector<32x32xf32>
    %cst_36 = arith.constant dense<0.000000e+00> : vector<16x32xf32>
    %72 = tpu.matmul %70, %71, %cst_36 {dimension_numbers = #tpu.dot_dimension_numbers<[1], [0], [0], [1], [0, 0, 1, 1], [], []>} : vector<16x32xf32>, vector<32x32xf32>, vector<16x32xf32> -> vector<16x32xf32>
    %cst_37 = arith.constant 0.000000e+00 : f32
    %73 = vector.broadcast %cst_37 : f32 to vector<16x32xf32>
    %74 = arith.maximumf %72, %73 : vector<16x32xf32>
    %75 = arith.addf %20, %74 : vector<16x32xf32>
    %76 = vector.shape_cast %75 : vector<16x32xf32> to vector<2x8x32xf32>
    %c0_38 = arith.constant 0 : index
    %c0_39 = arith.constant 0 : index
    %77 = vector.load %arg10[%c0_38, %c0_39] : memref<32x4xf32, #tpu.memory_space<vmem>>, vector<32x4xf32>
    %cst_40 = arith.constant dense<0.000000e+00> : vector<16x4xf32>
    %78 = tpu.matmul %75, %77, %cst_40 {dimension_numbers = #tpu.dot_dimension_numbers<[1], [0], [0], [1], [0, 0, 1, 1], [], []>} : vector<16x32xf32>, vector<32x4xf32>, vector<16x4xf32> -> vector<16x4xf32>
    %cst_41 = arith.constant dense<0xFF800000> : vector<16xf32>
    %79 = vector.multi_reduction <maximumf>, %78, %cst_41 [1] : vector<16x4xf32> to vector<16xf32>
    %80 = vector.shape_cast %79 : vector<16xf32> to vector<16x1xf32>
    %81 = vector.broadcast %80 : vector<16x1xf32> to vector<16x4xf32>
    %82 = arith.subf %78, %81 : vector<16x4xf32>
    %83 = math.exp %82 : vector<16x4xf32>
    %cst_42 = arith.constant dense<0.000000e+00> : vector<16xf32>
    %84 = vector.multi_reduction <add>, %83, %cst_42 [1] : vector<16x4xf32> to vector<16xf32>
    %85 = vector.shape_cast %84 : vector<16xf32> to vector<16x1xf32>
    %86 = vector.broadcast %85 : vector<16x1xf32> to vector<16x4xf32>
    %87 = arith.divf %83, %86 : vector<16x4xf32>
    %88 = vector.broadcast %13 : vector<16x1xf32> to vector<16x4xf32>
    %89 = arith.mulf %87, %88 : vector<16x4xf32>
    %90 = vector.shape_cast %89 : vector<16x4xf32> to vector<2x8x4xf32>
    "tpu.trace_start"() <{level = 10 : i32, message = "bsk,bsd->bkd"}> : () -> ()
    %cst_43 = arith.constant dense<0.000000e+00> : vector<2x4x32xf32>
    %91 = tpu.matmul %90, %76, %cst_43 {dimension_numbers = #tpu.dot_dimension_numbers<[1], [1], [2], [2], [0, 0, 0, 2, 1, 2], [0], [0]>} : vector<2x8x4xf32>, vector<2x8x32xf32>, vector<2x4x32xf32> -> vector<2x4x32xf32>
    "tpu.trace_stop"() : () -> ()
    "tpu.trace_start"() <{level = 10 : i32, message = "bik,bjk->bij"}> : () -> ()
    %cst_44 = arith.constant dense<0.000000e+00> : vector<2x8x8xf32>
    %92 = tpu.matmul %90, %90, %cst_44 {dimension_numbers = #tpu.dot_dimension_numbers<[2], [2], [1], [1], [0, 0, 0, 1, 1, 1], [0], [0]>} : vector<2x8x4xf32>, vector<2x8x4xf32>, vector<2x8x8xf32> -> vector<2x8x8xf32>
    "tpu.trace_stop"() : () -> ()
    %93 = arith.subf %37, %92 : vector<2x8x8xf32>
    %94 = arith.mulf %93, %93 : vector<2x8x8xf32>
    %95 = vector.shape_cast %94 : vector<2x8x8xf32> to vector<16x8xf32>
    %96 = vector.shape_cast %95 : vector<16x8xf32> to vector<1x16x8xf32>
    %cst_45 = arith.constant dense<0.000000e+00> : vector<1xf32>
    %97 = vector.multi_reduction <add>, %96, %cst_45 [1, 2] : vector<1x16x8xf32> to vector<1xf32>
    %98 = vector.shape_cast %97 : vector<1xf32> to vector<1x1x1xf32>
    %99 = vector.extract %98[0, 0, 0] : f32 from vector<1x1x1xf32>
    %100 = vector.broadcast %99 : f32 to vector<1x1xf32>
    %cst_46 = arith.constant 7.812500e-03 : f32
    %101 = vector.broadcast %cst_46 : f32 to vector<1x1xf32>
    %102 = arith.mulf %100, %101 : vector<1x1xf32>
    %cst_47 = arith.constant 0.000000e+00 : f32
    %103 = vector.broadcast %cst_47 : f32 to vector<16x4xf32>
    %104 = arith.subf %103, %89 : vector<16x4xf32>
    %cst_48 = arith.constant 9.99999997E-7 : f32
    %105 = vector.broadcast %cst_48 : f32 to vector<16x4xf32>
    %106 = arith.addf %89, %105 : vector<16x4xf32>
    %107 = math.log %106 : vector<16x4xf32>
    %108 = arith.mulf %104, %107 : vector<16x4xf32>
    %109 = vector.shape_cast %108 : vector<16x4xf32> to vector<1x16x4xf32>
    %cst_49 = arith.constant dense<0.000000e+00> : vector<1xf32>
    %110 = vector.multi_reduction <add>, %109, %cst_49 [1, 2] : vector<1x16x4xf32> to vector<1xf32>
    %111 = vector.shape_cast %110 : vector<1xf32> to vector<1x1x1xf32>
    %112 = vector.extract %111[0, 0, 0] : f32 from vector<1x1x1xf32>
    %113 = vector.broadcast %112 : f32 to vector<1x1xf32>
    %cst_50 = arith.constant 1.562500e-02 : f32
    %114 = vector.broadcast %cst_50 : f32 to vector<1x1xf32>
    %115 = arith.mulf %113, %114 : vector<1x1xf32>
    %116 = vector.shape_cast %91 : vector<2x4x32xf32> to vector<8x32xf32>
    %c0_51 = arith.constant 0 : index
    %c0_52 = arith.constant 0 : index
    %117 = vector.load %arg11[%c0_51, %c0_52] : memref<32x32xf32, #tpu.memory_space<vmem>>, vector<32x32xf32>
    %cst_53 = arith.constant dense<0.000000e+00> : vector<8x32xf32>
    %118 = tpu.matmul %116, %117, %cst_53 {dimension_numbers = #tpu.dot_dimension_numbers<[1], [0], [0], [1], [0, 0, 1, 1], [], []>} : vector<8x32xf32>, vector<32x32xf32>, vector<8x32xf32> -> vector<8x32xf32>
    %119 = math.tanh %118 : vector<8x32xf32>
    %120 = vector.broadcast %2 : vector<1x32xf32> to vector<8x32xf32>
    %121 = arith.mulf %119, %120 : vector<8x32xf32>
    %cst_54 = arith.constant dense<0.000000e+00> : vector<8xf32>
    %122 = vector.multi_reduction <add>, %121, %cst_54 [1] : vector<8x32xf32> to vector<8xf32>
    %123 = vector.shape_cast %122 : vector<8xf32> to vector<8x1xf32>
    %124 = vector.shape_cast %123 : vector<8x1xf32> to vector<2x4x1xf32>
    %cst_55 = arith.constant dense<0xFF800000> : vector<2x1xf32>
    %125 = vector.multi_reduction <maximumf>, %124, %cst_55 [1] : vector<2x4x1xf32> to vector<2x1xf32>
    %126 = vector.shape_cast %125 : vector<2x1xf32> to vector<2x1x1xf32>
    %127 = vector.broadcast %126 : vector<2x1x1xf32> to vector<2x4x1xf32>
    %128 = arith.subf %124, %127 : vector<2x4x1xf32>
    %129 = math.exp %128 : vector<2x4x1xf32>
    %cst_56 = arith.constant dense<0.000000e+00> : vector<2x1xf32>
    %130 = vector.multi_reduction <add>, %129, %cst_56 [1] : vector<2x4x1xf32> to vector<2x1xf32>
    %131 = vector.shape_cast %130 : vector<2x1xf32> to vector<2x1x1xf32>
    %132 = vector.broadcast %131 : vector<2x1x1xf32> to vector<2x4x1xf32>
    %133 = arith.divf %129, %132 : vector<2x4x1xf32>
    %134 = vector.broadcast %133 : vector<2x4x1xf32> to vector<2x4x32xf32>
    %135 = arith.mulf %134, %91 : vector<2x4x32xf32>
    %cst_57 = arith.constant dense<0.000000e+00> : vector<2x32xf32>
    %136 = vector.multi_reduction <add>, %135, %cst_57 [1] : vector<2x4x32xf32> to vector<2x32xf32>
    %c0_58 = arith.constant 0 : index
    %c0_59 = arith.constant 0 : index
    %137 = vector.load %arg12[%c0_58, %c0_59] : memref<32x5xf32, #tpu.memory_space<vmem>>, vector<32x5xf32>
    %cst_60 = arith.constant dense<0.000000e+00> : vector<2x5xf32>
    %138 = tpu.matmul %136, %137, %cst_60 {dimension_numbers = #tpu.dot_dimension_numbers<[1], [0], [0], [1], [0, 0, 1, 1], [], []>} : vector<2x32xf32>, vector<32x5xf32>, vector<2x5xf32> -> vector<2x5xf32>
    %139 = vector.broadcast %3 : vector<1x5xf32> to vector<2x5xf32>
    %140 = arith.addf %138, %139 : vector<2x5xf32>
    %cst_61 = arith.constant dense<0xFF800000> : vector<2xf32>
    %141 = vector.multi_reduction <maximumf>, %140, %cst_61 [1] : vector<2x5xf32> to vector<2xf32>
    %142 = vector.shape_cast %141 : vector<2xf32> to vector<2x1xf32>
    %143 = vector.broadcast %142 : vector<2x1xf32> to vector<2x5xf32>
    %144 = arith.subf %140, %143 : vector<2x5xf32>
    %145 = math.exp %144 : vector<2x5xf32>
    %cst_62 = arith.constant dense<0.000000e+00> : vector<2xf32>
    %146 = vector.multi_reduction <add>, %145, %cst_62 [1] : vector<2x5xf32> to vector<2xf32>
    %147 = vector.shape_cast %146 : vector<2xf32> to vector<2x1xf32>
    %148 = math.log %147 : vector<2x1xf32>
    %149 = vector.broadcast %148 : vector<2x1xf32> to vector<2x5xf32>
    %150 = arith.subf %144, %149 : vector<2x5xf32>
    %cst_63 = arith.constant 0.000000e+00 : f32
    %151 = vector.broadcast %cst_63 : f32 to vector<16x128xf32>
    %c0_64 = arith.constant 0 : index
    %c0_65 = arith.constant 0 : index
    %152 = vector.load %arg13[%c0_64, %c0_65] : memref<16x128xf32, #tpu.memory_space<vmem>>, vector<16x128xf32>
    tpu.vector_store %arg13[%c0_64, %c0_65], %151 {strides = array<i32>} : memref<16x128xf32, #tpu.memory_space<vmem>>, vector<16x128xf32>,
    %153 = vector.shape_cast %37 : vector<2x8x8xf32> to vector<16x8xf32>
    %c0_66 = arith.constant 0 : index
    %c0_67 = arith.constant 0 : index
    %154 = vector.load %arg13[%c0_66, %c0_67] : memref<16x128xf32, #tpu.memory_space<vmem>>, vector<16x8xf32>
    tpu.vector_store %arg13[%c0_66, %c0_67], %153 {strides = array<i32>} : memref<16x128xf32, #tpu.memory_space<vmem>>, vector<16x8xf32>,
    %c0_68 = arith.constant 0 : index
    %c8 = arith.constant 8 : index
    %155 = vector.load %arg13[%c0_68, %c8] : memref<16x128xf32, #tpu.memory_space<vmem>>, vector<16x4xf32>
    tpu.vector_store %arg13[%c0_68, %c8], %89 {strides = array<i32>} : memref<16x128xf32, #tpu.memory_space<vmem>>, vector<16x4xf32>,
    %156 = vector.shape_cast %133 : vector<2x4x1xf32> to vector<8x1xf32>
    %c0_69 = arith.constant 0 : index
    %c16 = arith.constant 16 : index
    %157 = vector.load %arg13[%c0_69, %c16] : memref<16x128xf32, #tpu.memory_space<vmem>>, vector<8x1xf32>
    tpu.vector_store %arg13[%c0_69, %c16], %156 {strides = array<i32>} : memref<16x128xf32, #tpu.memory_space<vmem>>, vector<8x1xf32>,
    %c0_70 = arith.constant 0 : index
    %c24 = arith.constant 24 : index
    %158 = vector.load %arg13[%c0_70, %c24] : memref<16x128xf32, #tpu.memory_space<vmem>>, vector<2x5xf32>
    tpu.vector_store %arg13[%c0_70, %c24], %150 {strides = array<i32>} : memref<16x128xf32, #tpu.memory_space<vmem>>, vector<2x5xf32>,
    %c0_71 = arith.constant 0 : index
    %c32 = arith.constant 32 : index
    %159 = vector.load %arg13[%c0_71, %c32] : memref<16x128xf32, #tpu.memory_space<vmem>>, vector<1x1xf32>
    tpu.vector_store %arg13[%c0_71, %c32], %68 {strides = array<i32>} : memref<16x128xf32, #tpu.memory_space<vmem>>, vector<1x1xf32>,
    %c0_72 = arith.constant 0 : index
    %c33 = arith.constant 33 : index
    %160 = vector.load %arg13[%c0_72, %c33] : memref<16x128xf32, #tpu.memory_space<vmem>>, vector<1x1xf32>
    tpu.vector_store %arg13[%c0_72, %c33], %102 {strides = array<i32>} : memref<16x128xf32, #tpu.memory_space<vmem>>, vector<1x1xf32>,
    %c0_73 = arith.constant 0 : index
    %c34 = arith.constant 34 : index
    %161 = vector.load %arg13[%c0_73, %c34] : memref<16x128xf32, #tpu.memory_space<vmem>>, vector<1x1xf32>
    tpu.vector_store %arg13[%c0_73, %c34], %115 {strides = array<i32>} : memref<16x128xf32, #tpu.memory_space<vmem>>, vector<1x1xf32>,
    return
  }
  func.func @transform_0(%arg0: i32) -> (i32, i32) {
    %c0_i32 = arith.constant 0 : i32
    %c0_i32_0 = arith.constant 0 : i32
    %c0_i32_1 = arith.constant 0 : i32
    return %c0_i32, %c0_i32_0 : i32, i32
  }
  func.func @transform_1(%arg0: i32) -> (i32, i32) {
    %c0_i32 = arith.constant 0 : i32
    %c0_i32_0 = arith.constant 0 : i32
    %c0_i32_1 = arith.constant 0 : i32
    return %c0_i32, %c0_i32_0 : i32, i32
  }
  func.func @transform_2(%arg0: i32) -> (i32, i32) {
    %c0_i32 = arith.constant 0 : i32
    %c0_i32_0 = arith.constant 0 : i32
    %c0_i32_1 = arith.constant 0 : i32
    return %c0_i32, %c0_i32_0 : i32, i32
  }
  func.func @transform_3(%arg0: i32) -> (i32, i32, i32) {
    %c0_i32 = arith.constant 0 : i32
    %c0_i32_0 = arith.constant 0 : i32
    %c0_i32_1 = arith.constant 0 : i32
    %c0_i32_2 = arith.constant 0 : i32
    return %c0_i32, %c0_i32_0, %c0_i32_1 : i32, i32, i32
  }
  func.func @transform_4(%arg0: i32) -> (i32, i32, i32) {
    %c0_i32 = arith.constant 0 : i32
    %c0_i32_0 = arith.constant 0 : i32
    %c0_i32_1 = arith.constant 0 : i32
    %c0_i32_2 = arith.constant 0 : i32
    return %c0_i32, %c0_i32_0, %c0_i32_1 : i32, i32, i32
  }
  func.func @transform_5(%arg0: i32) -> (i32, i32) {
    %c0_i32 = arith.constant 0 : i32
    %c0_i32_0 = arith.constant 0 : i32
    %c0_i32_1 = arith.constant 0 : i32
    return %c0_i32, %c0_i32_0 : i32, i32
  }
  func.func @transform_6(%arg0: i32) -> (i32, i32) {
    %c0_i32 = arith.constant 0 : i32
    %c0_i32_0 = arith.constant 0 : i32
    %c0_i32_1 = arith.constant 0 : i32
    return %c0_i32, %c0_i32_0 : i32, i32
  }
  func.func @transform_7(%arg0: i32) -> (i32, i32) {
    %c0_i32 = arith.constant 0 : i32
    %c0_i32_0 = arith.constant 0 : i32
    %c0_i32_1 = arith.constant 0 : i32
    return %c0_i32, %c0_i32_0 : i32, i32
  }
  func.func @transform_8(%arg0: i32) -> (i32, i32) {
    %c0_i32 = arith.constant 0 : i32
    %c0_i32_0 = arith.constant 0 : i32
    %c0_i32_1 = arith.constant 0 : i32
    return %c0_i32, %c0_i32_0 : i32, i32
  }
  func.func @transform_9(%arg0: i32) -> (i32, i32) {
    %c0_i32 = arith.constant 0 : i32
    %c0_i32_0 = arith.constant 0 : i32
    %c0_i32_1 = arith.constant 0 : i32
    return %c0_i32, %c0_i32_0 : i32, i32
  }
  func.func @transform_10(%arg0: i32) -> (i32, i32) {
    %c0_i32 = arith.constant 0 : i32
    %c0_i32_0 = arith.constant 0 : i32
    %c0_i32_1 = arith.constant 0 : i32
    return %c0_i32, %c0_i32_0 : i32, i32
  }
  func.func @transform_11(%arg0: i32) -> (i32, i32) {
    %c0_i32 = arith.constant 0 : i32
    %c0_i32_0 = arith.constant 0 : i32
    %c0_i32_1 = arith.constant 0 : i32
    return %c0_i32, %c0_i32_0 : i32, i32
  }
  func.func @transform_12(%arg0: i32) -> (i32, i32) {
    %c0_i32 = arith.constant 0 : i32
    %c0_i32_0 = arith.constant 0 : i32
    %c0_i32_1 = arith.constant 0 : i32
    return %c0_i32, %c0_i32_0 : i32, i32
  }
}

</mosaic_0001>

<llo_original>
// kernel: tpu_custom_call.1
$region0: #{tpu_custom_call.1}
  #allocation0 [shape = 'u32[]', space=smem, size = 0x4, offset = 0x4, fixed_abs, tag = 'smem constant byte address 0x4 - core index']
  #allocation1 [shape = 'u32[144,128]{1,0:T(1,128)}', space=vmem, size = 0x12000, scoped, tag = 'internal scratch']
  %s0 = inlined_call_operand.vmem [shape: s32[16,1], index: 0, kind: input, shape index: {}]
  %s1 = inlined_call_operand.vmem [shape: f32[16,1], index: 1, kind: input, shape index: {}]
  %s2 = inlined_call_operand.vmem [shape: f32[16,1], index: 2, kind: input, shape index: {}]
  %s3 = inlined_call_operand.vmem [shape: f32[2,8,8], index: 3, kind: input, shape index: {}]
  %s4 = inlined_call_operand.vmem [shape: f32[2,8,8], index: 4, kind: input, shape index: {}]
  %s5 = inlined_call_operand.vmem [shape: f32[50,32], index: 5, kind: input, shape index: {}]
  %s6 = inlined_call_operand.vmem [shape: f32[4,32], index: 6, kind: input, shape index: {}]
  %s7 = inlined_call_operand.vmem [shape: f32[32,64], index: 7, kind: input, shape index: {}]
  %s8 = inlined_call_operand.vmem [shape: f32[32,32], index: 8, kind: input, shape index: {}]
  %s9 = inlined_call_operand.vmem [shape: f32[32,4], index: 9, kind: input, shape index: {}]
  %s10 = inlined_call_operand.vmem [shape: f32[32,32], index: 10, kind: input, shape index: {}]
  %s11 = inlined_call_operand.vmem [shape: f32[32,5], index: 11, kind: input, shape index: {}]
  %s12 = inlined_call_operand.hbm [shape: f32[16,128], index: 12, kind: output, shape index: {}]
  %s13 = sld [smem:[#allocation0]]
  $region58: #{tpu_custom_call.1} parent=0
    _
  %s15 = ssub.s32 1, %s13
  %s16 = scalar_select 0, %s15, %s13
  $region1: #{tpu_custom_call.1} parent=0
    #allocation2 [shape = 'u8[8192]{0}', space=vmem, size = 0x2000, scoped, tag = 'output window, operand 0, single buffered']
    #allocation3 [shape = 's32[1]{0}', space=sflag, size = 0x4, scoped, tag = 'scoped memory for tpu_custom_call.1']
    %17 = vsyncpa [#allocation3], 0
    // Predicated region
    $region2: #{tpu_custom_call.1} parent=1 // pred_check
      _
    $region3: #{tpu_custom_call.1} parent=1 // pred_check_branch
      %19 = sbr.rel (0) target = $region5
    $region4: #{tpu_custom_call.1} parent=1 // pred_region
      _
    $region5: #{tpu_custom_call.1} parent=1 // pred_fallthru
      _
    // Predicated region
    $region6: #{tpu_custom_call.1} parent=1 // pred_check
      _
    $region7: #{tpu_custom_call.1} parent=1 // pred_check_branch
      %21 = sbr.rel (0) target = $region9
    $region8: #{tpu_custom_call.1} parent=1 // pred_region
      _
    $region9: #{tpu_custom_call.1} parent=1 // pred_fallthru
      _
    // Predicated region
    $region10: #{tpu_custom_call.1} parent=1 // pred_check
      _
    $region11: #{tpu_custom_call.1} parent=1 // pred_check_branch
      %23 = sbr.rel (0) target = $region13
    $region12: #{tpu_custom_call.1} parent=1 // pred_region
      _
    $region13: #{tpu_custom_call.1} parent=1 // pred_fallthru
      _
    // Predicated region
    $region14: #{tpu_custom_call.1} parent=1 // pred_check
      _
    $region15: #{tpu_custom_call.1} parent=1 // pred_check_branch
      %25 = sbr.rel (0) target = $region17
    $region16: #{tpu_custom_call.1} parent=1 // pred_region
      _
    $region17: #{tpu_custom_call.1} parent=1 // pred_fallthru
      _
    // Predicated region
    $region18: #{tpu_custom_call.1} parent=1 // pred_check
      _
    $region19: #{tpu_custom_call.1} parent=1 // pred_check_branch
      %27 = sbr.rel (0) target = $region21
    $region20: #{tpu_custom_call.1} parent=1 // pred_region
      _
    $region21: #{tpu_custom_call.1} parent=1 // pred_fallthru
      _
    // Predicated region
    $region22: #{tpu_custom_call.1} parent=1 // pred_check
      _
    $region23: #{tpu_custom_call.1} parent=1 // pred_check_branch
      %29 = sbr.rel (0) target = $region25
    $region24: #{tpu_custom_call.1} parent=1 // pred_region
      _
    $region25: #{tpu_custom_call.1} parent=1 // pred_fallthru
      _
    // Predicated region
    $region26: #{tpu_custom_call.1} parent=1 // pred_check
      _
    $region27: #{tpu_custom_call.1} parent=1 // pred_check_branch
      %31 = sbr.rel (0) target = $region29
    $region28: #{tpu_custom_call.1} parent=1 // pred_region
      _
    $region29: #{tpu_custom_call.1} parent=1 // pred_fallthru
      _
    // Predicated region
    $region30: #{tpu_custom_call.1} parent=1 // pred_check
      _
    $region31: #{tpu_custom_call.1} parent=1 // pred_check_branch
      %33 = sbr.rel (0) target = $region33
    $region32: #{tpu_custom_call.1} parent=1 // pred_region
      _
    $region33: #{tpu_custom_call.1} parent=1 // pred_fallthru
      _
    // Predicated region
    $region34: #{tpu_custom_call.1} parent=1 // pred_check
      _
    $region35: #{tpu_custom_call.1} parent=1 // pred_check_branch
      %35 = sbr.rel (0) target = $region37
    $region36: #{tpu_custom_call.1} parent=1 // pred_region
      _
    $region37: #{tpu_custom_call.1} parent=1 // pred_fallthru
      _
    // Predicated region
    $region38: #{tpu_custom_call.1} parent=1 // pred_check
      _
    $region39: #{tpu_custom_call.1} parent=1 // pred_check_branch
      %37 = sbr.rel (0) target = $region41
    $region40: #{tpu_custom_call.1} parent=1 // pred_region
      _
    $region41: #{tpu_custom_call.1} parent=1 // pred_fallthru
      _
    // Predicated region
    $region42: #{tpu_custom_call.1} parent=1 // pred_check
      _
    $region43: #{tpu_custom_call.1} parent=1 // pred_check_branch
      %39 = sbr.rel (0) target = $region45
    $region44: #{tpu_custom_call.1} parent=1 // pred_region
      _
    $region45: #{tpu_custom_call.1} parent=1 // pred_fallthru
      _
    // Predicated region
    $region46: #{tpu_custom_call.1} parent=1 // pred_check
      _
    $region47: #{tpu_custom_call.1} parent=1 // pred_check_branch
      %41 = sbr.rel (0) target = $region49
    $region48: #{tpu_custom_call.1} parent=1 // pred_region
      _
    $region49: #{tpu_custom_call.1} parent=1 // pred_fallthru
      _
    %v42 = vld [vmem:[%s6] sm:$0x1]
    %v43 = vld [vmem:[%s6 + $0x1] sm:$0x1]
    %v44 = vld [vmem:[%s6 + $0x2] sm:$0x1]
    %v45 = vld [vmem:[%s6 + $0x3] sm:$0x1]
    %v46 = vld [vmem:[%s0] sm:$0xff]
    %v47 = vld [vmem:[%s0 + $0x8] sm:$0xff]
    %v48 = vlaneseq
    %v49 = vand.u32 %v48, 127
    %50 = vset.pattern.permute.xlu0 0
    %51 = vperm.xlu0 %50, %v46
    %v52 = vpop.permute.xlu0 %51
    %53 = vset.pattern.permute.xlu0 0
    %54 = vperm.xlu0 %53, %v47
    %v55 = vpop.permute.xlu0 %54
    %vm56 = vcmp.eq.s32.totalorder %v52, %v49
    %vm57 = vcmp.eq.s32.totalorder %v55, %v49
    %v58 = vsel %vm56, 1, 0
    %v59 = vsel %vm57, 1, 0
    %v60 = vcvt.s32.f32 %v58
    %v61 = vcvt.s32.f32 %v59
    %v62 = vld [vmem:[%s5] sm:$0xff]
    %v63 = vld [vmem:[%s5 + $0x8] sm:$0xff]
    %v64 = vld [vmem:[%s5 + $0x10] sm:$0xff]
    %v65 = vld [vmem:[%s5 + $0x18] sm:$0xff]
    %v66 = vld [vmem:[%s5 + $0x20] sm:$0xff]
    %v67 = vld [vmem:[%s5 + $0x28] sm:$0xff]
    %v68 = vld [vmem:[%s5 + $0x30] sm:$0x3]
    %v69 = vld [vmem:[%s1] sm:$0xff]
    %v70 = vld [vmem:[%s1 + $0x8] sm:$0xff]
    %v71 = vld [vmem:[%s2] sm:$0xff]
    %v72 = vld [vmem:[%s2 + $0x8] sm:$0xff]
    %74 = vset.pattern.permute.xlu0 0
    %75 = vperm.xlu0 %74, %v69
    %v76 = vpop.permute.xlu0 %75
    %79 = vset.pattern.permute.xlu0 0
    %80 = vperm.xlu0 %79, %v70
    %v81 = vpop.permute.xlu0 %80
    %v83 = vlaneseq
    %v84 = vshrl.u32 %v83, 7
    %v85 = vsub.s32 0, %v84
    %v86 = vrot.slane %v42, %v85
    %v87 = vmul.f32 %v76, %v86
    %v88 = vmul.f32 %v81, %v86
    %v89 = vlaneseq
    %v90 = vshrl.u32 %v89, 7
    %v91 = vsub.s32 0, %v90
    %v92 = vrot.slane %v43, %v91
    %v93 = vadd.f32 %v87, %v92
    %v94 = vadd.f32 %v88, %v92
    %v95 = vtanh.pop %v93
    %v96 = vtanh.pop %v94
    %vm97 = vcmask 408576
    %v99 = vsel %vm97, %v60, 0
    %v102 = vsel %vm97, %v61, 0
    %vm104 = vcmask 1041408
    %v106 = vsel %vm104, %v68, 0
    %108 = vmatprep.subr.mxu0 0.0
    %109 = vmatpush1.msra.mxu0 %v62
    %110 = vmatprep.subr.mxu0 0.0
    %111 = vmatpush1.msra.mxu0 %v63
    %112 = vmatprep.subr.mxu0 0.0
    %113 = vmatpush1.msra.mxu0 %v64
    %114 = vmatprep.subr.mxu0 0.0
    %115 = vmatpush1.msra.mxu0 %v65
    %116 = vmatprep.subr.mxu0 0.0
    %117 = vmatpush1.msra.mxu0 %v66
    %118 = vmatprep.subr.mxu0 0.0
    %119 = vmatpush1.msra.mxu0 %v67
    %120 = vmatprep.subr.mxu0 0.0
    %121 = vmatpush1.msra.mxu0 %v106
    %122 = vmatprep.subr.mxu0 0.0
    %123 = vmatpush1.msra.mxu0 0.0
    %124 = vmatprep.subr.mxu0 0.0
    %125 = vmatpush1.msra.mxu0 0.0
    %126 = vmatprep.subr.mxu0 0.0
    %127 = vmatpush1.msra.mxu0 0.0
    %128 = vmatprep.subr.mxu0 0.0
    %129 = vmatpush1.msra.mxu0 0.0
    %130 = vmatprep.subr.mxu0 0.0
    %131 = vmatpush1.msra.mxu0 0.0
    %132 = vmatprep.subr.mxu0 0.0
    %133 = vmatpush1.msra.mxu0 0.0
    %134 = vmatprep.subr.mxu0 0.0
    %135 = vmatpush1.msra.mxu0 0.0
    %136 = vmatprep.subr.mxu0 0.0
    %137 = vmatpush1.msra.mxu0 0.0
    %138 = vmatprep.subr.mxu0 0.0
    %139 = vmatpush1.msra.mxu0 0.0
    %140 = vmatprep.subr.mxu0 0.0
    %141 = vmatpush1.msra.mxu0 0.0
    %142 = vmatprep.subr.mxu0 0.0
    %143 = vmatpush1.msra.mxu0 0.0
    %144 = vmatprep.subr.mxu0 0.0
    %145 = vmatpush1.msra.mxu0 0.0
    %146 = vmatprep.subr.mxu0 0.0
    %147 = vmatpush1.msra.mxu0 0.0
    %148 = vmatprep.subr.mxu0 0.0
    %149 = vmatpush1.msra.mxu0 0.0
    %150 = vmatprep.subr.mxu0 0.0
    %151 = vmatpush1.msra.mxu0 0.0
    %152 = vmatprep.subr.mxu0 0.0
    %153 = vmatpush1.msra.mxu0 0.0
    %154 = vmatprep.subr.mxu0 0.0
    %155 = vmatpush1.msra.mxu0 0.0
    %156 = vmatprep.subr.mxu0 0.0
    %157 = vmatpush1.msra.mxu0 0.0
    %158 = vmatprep.subr.mxu0 0.0
    %159 = vmatpush1.msra.mxu0 0.0
    %160 = vmatprep.subr.mxu0 0.0
    %161 = vmatpush1.msra.mxu0 0.0
    %162 = vmatprep.subr.mxu0 0.0
    %163 = vmatpush1.msra.mxu0 0.0
    %164 = vmatprep.subr.mxu0 0.0
    %165 = vmatpush1.msra.mxu0 0.0
    %166 = vmatprep.subr.mxu0 0.0
    %167 = vmatpush1.msra.mxu0 0.0
    %168 = vmatprep.subr.mxu0 0.0
    %169 = vmatpush1.msra.mxu0 0.0
    %170 = vmatprep.subr.mxu0 0.0
    %171 = vmatpush1.msra.mxu0 0.0
    %172 = vmatprep.mubr.f32.mxu0 0.0
    %173 = vmatmul.mubr.f32.gmra.mrb[0].mxu0 %v99
    %v174 = vpop.f32.mrb[0].mxu0
    %v175 = vadd.f32 %v95, %v174
    %v176 = vpop.f32.mrb[0].mxu0
    %177 = vmatprep.mubr.f32.mxu0 0.0
    %178 = vmatmul.mubr.f32.gmra.mrb[0].mxu0 %v102
    %v179 = vpop.f32.mrb[0].mxu0
    %v180 = vadd.f32 %v96, %v179
    %v181 = vpop.f32.mrb[0].mxu0
    %182 = vdwg.mxu0
    %v183 = vld [vmem:[%s7] sm:$0xff]
    %v184 = vld [vmem:[%s7 + $0x8] sm:$0xff]
    %v185 = vld [vmem:[%s7 + $0x10] sm:$0xff]
    %v186 = vld [vmem:[%s7 + $0x18] sm:$0xff]
    %vm187 = vcmask 261120
    %v189 = vsel %vm187, %v175, 0
    %v192 = vsel %vm187, %v180, 0
    %194 = vmatprep.subr.mxu0 0.0
    %195 = vmatpush1.msra.mxu0 %v183
    %196 = vmatprep.subr.mxu0 0.0
    %197 = vmatpush1.msra.mxu0 %v184
    %198 = vmatprep.subr.mxu0 0.0
    %199 = vmatpush1.msra.mxu0 %v185
    %200 = vmatprep.subr.mxu0 0.0
    %201 = vmatpush1.msra.mxu0 %v186
    %202 = vmatprep.subr.mxu0 0.0
    %203 = vmatpush1.msra.mxu0 0.0
    %204 = vmatprep.subr.mxu0 0.0
    %205 = vmatpush1.msra.mxu0 0.0
    %206 = vmatprep.subr.mxu0 0.0
    %207 = vmatpush1.msra.mxu0 0.0
    %208 = vmatprep.subr.mxu0 0.0
    %209 = vmatpush1.msra.mxu0 0.0
    %210 = vmatprep.subr.mxu0 0.0
    %211 = vmatpush1.msra.mxu0 0.0
    %212 = vmatprep.subr.mxu0 0.0
    %213 = vmatpush1.msra.mxu0 0.0
    %214 = vmatprep.subr.mxu0 0.0
    %215 = vmatpush1.msra.mxu0 0.0
    %216 = vmatprep.subr.mxu0 0.0
    %217 = vmatpush1.msra.mxu0 0.0
    %218 = vmatprep.subr.mxu0 0.0
    %219 = vmatpush1.msra.mxu0 0.0
    %220 = vmatprep.subr.mxu0 0.0
    %221 = vmatpush1.msra.mxu0 0.0
    %222 = vmatprep.subr.mxu0 0.0
    %223 = vmatpush1.msra.mxu0 0.0
    %224 = vmatprep.subr.mxu0 0.0
    %225 = vmatpush1.msra.mxu0 0.0
    %226 = vmatprep.subr.mxu0 0.0
    %227 = vmatpush1.msra.mxu0 0.0
    %228 = vmatprep.subr.mxu0 0.0
    %229 = vmatpush1.msra.mxu0 0.0
    %230 = vmatprep.subr.mxu0 0.0
    %231 = vmatpush1.msra.mxu0 0.0
    %232 = vmatprep.subr.mxu0 0.0
    %233 = vmatpush1.msra.mxu0 0.0
    %234 = vmatprep.subr.mxu0 0.0
    %235 = vmatpush1.msra.mxu0 0.0
    %236 = vmatprep.subr.mxu0 0.0
    %237 = vmatpush1.msra.mxu0 0.0
    %238 = vmatprep.subr.mxu0 0.0
    %239 = vmatpush1.msra.mxu0 0.0
    %240 = vmatprep.subr.mxu0 0.0
    %241 = vmatpush1.msra.mxu0 0.0
    %242 = vmatprep.subr.mxu0 0.0
    %243 = vmatpush1.msra.mxu0 0.0
    %244 = vmatprep.subr.mxu0 0.0
    %245 = vmatpush1.msra.mxu0 0.0
    %246 = vmatprep.subr.mxu0 0.0
    %247 = vmatpush1.msra.mxu0 0.0
    %248 = vmatprep.subr.mxu0 0.0
    %249 = vmatpush1.msra.mxu0 0.0
    %250 = vmatprep.subr.mxu0 0.0
    %251 = vmatpush1.msra.mxu0 0.0
    %252 = vmatprep.subr.mxu0 0.0
    %253 = vmatpush1.msra.mxu0 0.0
    %254 = vmatprep.subr.mxu0 0.0
    %255 = vmatpush1.msra.mxu0 0.0
    %256 = vmatprep.subr.mxu0 0.0
    %257 = vmatpush1.msra.mxu0 0.0
    %258 = vmatprep.mubr.f32.mxu0 0.0
    %259 = vmatmul.mubr.f32.gmra.mrb[0].mxu0 %v189
    %v260 = vpop.f32.mrb[0].mxu0
    %v261 = vadd.f32 0.0, %v260
    %v262 = vpop.f32.mrb[0].mxu0
    %263 = vmatprep.mubr.f32.mxu0 0.0
    %264 = vmatmul.mubr.f32.gmra.mrb[0].mxu0 %v192
    %v265 = vpop.f32.mrb[0].mxu0
    %v266 = vadd.f32 0.0, %v265
    %v267 = vpop.f32.mrb[0].mxu0
    %268 = vdwg.mxu0
    %270 = vrot.lane.b32.xlu0 %v261, 96
    %v271 = vpop.permute.xlu0 %270
    %v272 = vsel %vm187, %v261, 0
    %v274 = vsel %vm187, %v271, 0
    %276 = vmatprep.subr.mxu0 0.0
    %277 = vmatpush1.xpose.msra.mxu0 %v274
    %278 = vmatprep.subr.mxu0 0.0
    %279 = vmatpush1.xpose.msra.mxu0 0.0
    %280 = vmatprep.subr.mxu0 0.0
    %281 = vmatpush1.xpose.msra.mxu0 0.0
    %282 = vmatprep.subr.mxu0 0.0
    %283 = vmatpush1.xpose.msra.mxu0 0.0
    %284 = vmatprep.subr.mxu0 0.0
    %285 = vmatpush1.xpose.msra.mxu0 0.0
    %286 = vmatprep.subr.mxu0 0.0
    %287 = vmatpush1.xpose.msra.mxu0 0.0
    %288 = vmatprep.subr.mxu0 0.0
    %289 = vmatpush1.xpose.msra.mxu0 0.0
    %290 = vmatprep.subr.mxu0 0.0
    %291 = vmatpush1.xpose.msra.mxu0 0.0
    %292 = vmatprep.subr.mxu0 0.0
    %293 = vmatpush1.xpose.msra.mxu0 0.0
    %294 = vmatprep.subr.mxu0 0.0
    %295 = vmatpush1.xpose.msra.mxu0 0.0
    %296 = vmatprep.subr.mxu0 0.0
    %297 = vmatpush1.xpose.msra.mxu0 0.0
    %298 = vmatprep.subr.mxu0 0.0
    %299 = vmatpush1.xpose.msra.mxu0 0.0
    %300 = vmatprep.subr.mxu0 0.0
    %301 = vmatpush1.xpose.msra.mxu0 0.0
    %302 = vmatprep.subr.mxu0 0.0
    %303 = vmatpush1.xpose.msra.mxu0 0.0
    %304 = vmatprep.subr.mxu0 0.0
    %305 = vmatpush1.xpose.msra.mxu0 0.0
    %306 = vmatprep.subr.mxu0 0.0
    %307 = vmatpush1.xpose.msra.mxu0 0.0
    %308 = vmatprep.subr.mxu0 0.0
    %309 = vmatpush1.xpose.msra.mxu0 0.0
    %310 = vmatprep.subr.mxu0 0.0
    %311 = vmatpush1.xpose.msra.mxu0 0.0
    %312 = vmatprep.subr.mxu0 0.0
    %313 = vmatpush1.xpose.msra.mxu0 0.0
    %314 = vmatprep.subr.mxu0 0.0
    %315 = vmatpush1.xpose.msra.mxu0 0.0
    %316 = vmatprep.subr.mxu0 0.0
    %317 = vmatpush1.xpose.msra.mxu0 0.0
    %318 = vmatprep.subr.mxu0 0.0
    %319 = vmatpush1.xpose.msra.mxu0 0.0
    %320 = vmatprep.subr.mxu0 0.0
    %321 = vmatpush1.xpose.msra.mxu0 0.0
    %322 = vmatprep.subr.mxu0 0.0
    %323 = vmatpush1.xpose.msra.mxu0 0.0
    %324 = vmatprep.subr.mxu0 0.0
    %325 = vmatpush1.xpose.msra.mxu0 0.0
    %326 = vmatprep.subr.mxu0 0.0
    %327 = vmatpush1.xpose.msra.mxu0 0.0
    %328 = vmatprep.subr.mxu0 0.0
    %329 = vmatpush1.xpose.msra.mxu0 0.0
    %330 = vmatprep.subr.mxu0 0.0
    %331 = vmatpush1.xpose.msra.mxu0 0.0
    %332 = vmatprep.subr.mxu0 0.0
    %333 = vmatpush1.xpose.msra.mxu0 0.0
    %334 = vmatprep.subr.mxu0 0.0
    %335 = vmatpush1.xpose.msra.mxu0 0.0
    %336 = vmatprep.subr.mxu0 0.0
    %337 = vmatpush1.xpose.msra.mxu0 0.0
    %338 = vmatprep.subr.mxu0 0.0
    %339 = vmatpush1.xpose.msra.mxu0 0.0
    %340 = vmatprep.mubr.f32.mxu0 0.0
    %341 = vmatmul.mubr.f32.gmra.mrb[0].mxu0 %v272
    %v342 = vpop.f32.mrb[0].mxu0
    %v343 = vadd.f32 0.0, %v342
    %v344 = vpop.f32.mrb[0].mxu0
    %345 = vdwg.mxu0
    %347 = vrot.lane.b32.xlu0 %v266, 96
    %v348 = vpop.permute.xlu0 %347
    %v349 = vsel %vm187, %v266, 0
    %v351 = vsel %vm187, %v348, 0
    %353 = vmatprep.subr.mxu0 0.0
    %354 = vmatpush1.xpose.msra.mxu0 %v351
    %355 = vmatprep.subr.mxu0 0.0
    %356 = vmatpush1.xpose.msra.mxu0 0.0
    %357 = vmatprep.subr.mxu0 0.0
    %358 = vmatpush1.xpose.msra.mxu0 0.0
    %359 = vmatprep.subr.mxu0 0.0
    %360 = vmatpush1.xpose.msra.mxu0 0.0
    %361 = vmatprep.subr.mxu0 0.0
    %362 = vmatpush1.xpose.msra.mxu0 0.0
    %363 = vmatprep.subr.mxu0 0.0
    %364 = vmatpush1.xpose.msra.mxu0 0.0
    %365 = vmatprep.subr.mxu0 0.0
    %366 = vmatpush1.xpose.msra.mxu0 0.0
    %367 = vmatprep.subr.mxu0 0.0
    %368 = vmatpush1.xpose.msra.mxu0 0.0
    %369 = vmatprep.subr.mxu0 0.0
    %370 = vmatpush1.xpose.msra.mxu0 0.0
    %371 = vmatprep.subr.mxu0 0.0
    %372 = vmatpush1.xpose.msra.mxu0 0.0
    %373 = vmatprep.subr.mxu0 0.0
    %374 = vmatpush1.xpose.msra.mxu0 0.0
    %375 = vmatprep.subr.mxu0 0.0
    %376 = vmatpush1.xpose.msra.mxu0 0.0
    %377 = vmatprep.subr.mxu0 0.0
    %378 = vmatpush1.xpose.msra.mxu0 0.0
    %379 = vmatprep.subr.mxu0 0.0
    %380 = vmatpush1.xpose.msra.mxu0 0.0
    %381 = vmatprep.subr.mxu0 0.0
    %382 = vmatpush1.xpose.msra.mxu0 0.0
    %383 = vmatprep.subr.mxu0 0.0
    %384 = vmatpush1.xpose.msra.mxu0 0.0
    %385 = vmatprep.subr.mxu0 0.0
    %386 = vmatpush1.xpose.msra.mxu0 0.0
    %387 = vmatprep.subr.mxu0 0.0
    %388 = vmatpush1.xpose.msra.mxu0 0.0
    %389 = vmatprep.subr.mxu0 0.0
    %390 = vmatpush1.xpose.msra.mxu0 0.0
    %391 = vmatprep.subr.mxu0 0.0
    %392 = vmatpush1.xpose.msra.mxu0 0.0
    %393 = vmatprep.subr.mxu0 0.0
    %394 = vmatpush1.xpose.msra.mxu0 0.0
    %395 = vmatprep.subr.mxu0 0.0
    %396 = vmatpush1.xpose.msra.mxu0 0.0
    %397 = vmatprep.subr.mxu0 0.0
    %398 = vmatpush1.xpose.msra.mxu0 0.0
    %399 = vmatprep.subr.mxu0 0.0
    %400 = vmatpush1.xpose.msra.mxu0 0.0
    %401 = vmatprep.subr.mxu0 0.0
    %402 = vmatpush1.xpose.msra.mxu0 0.0
    %403 = vmatprep.subr.mxu0 0.0
    %404 = vmatpush1.xpose.msra.mxu0 0.0
    %405 = vmatprep.subr.mxu0 0.0
    %406 = vmatpush1.xpose.msra.mxu0 0.0
    %407 = vmatprep.subr.mxu0 0.0
    %408 = vmatpush1.xpose.msra.mxu0 0.0
    %409 = vmatprep.subr.mxu0 0.0
    %410 = vmatpush1.xpose.msra.mxu0 0.0
    %411 = vmatprep.subr.mxu0 0.0
    %412 = vmatpush1.xpose.msra.mxu0 0.0
    %413 = vmatprep.subr.mxu0 0.0
    %414 = vmatpush1.xpose.msra.mxu0 0.0
    %415 = vmatprep.subr.mxu0 0.0
    %416 = vmatpush1.xpose.msra.mxu0 0.0
    %417 = vmatprep.mubr.f32.mxu0 0.0
    %418 = vmatmul.mubr.f32.gmra.mrb[0].mxu0 %v349
    %v419 = vpop.f32.mrb[0].mxu0
    %v420 = vadd.f32 0.0, %v419
    %v421 = vpop.f32.mrb[0].mxu0
    %422 = vdwg.mxu0
    %v423 = vmul.f32 %v343, 0.17677669
    %v424 = vmul.f32 %v420, 0.17677669
    %v425 = vld [vmem:[%s3] sm:$0xff]
    %v426 = vld [vmem:[%s3 + $0x8] sm:$0xff]
    %v427 = vxor.u32 %v423, 2147483648
    %v428 = vxor.u32 %v424, 2147483648
    %v429 = vmul.f32 %v427, 1.442695
    %v430 = vpow.pop %v429
    %v431 = vmul.f32 %v428, 1.442695
    %v432 = vpow.pop %v431
    %v433 = vadd.f32 %v430, 1.0
    %v434 = vadd.f32 %v432, 1.0
    %v435 = vrcp.pop %v433
    %v436 = vmul.f32 1.0, %v435
    %v437 = vrcp.pop %v434
    %v438 = vmul.f32 1.0, %v437
    %v439 = vmul.f32 %v436, %v425
    %v440 = vmul.f32 %v438, %v426
    %v441 = vld [vmem:[%s4] sm:$0xff]
    %v442 = vld [vmem:[%s4 + $0x8] sm:$0xff]
    %v443 = vadd.f32 %v439, 1e-06
    %v444 = vadd.f32 %v440, 1e-06
    %v445 = vadd.f32 %v441, 1e-06
    %v446 = vadd.f32 %v442, 1e-06
    %v447 = vrcp.pop %v445
    %v448 = vmul.f32 %v443, %v447
    %v449 = vrcp.pop %v446
    %v450 = vmul.f32 %v444, %v449
    %v451 = vlog2.pop %v448
    %v452 = vmul.f32 %v451, 0.6931472
    %v453 = vlog2.pop %v450
    %v454 = vmul.f32 %v453, 0.6931472
    %v455 = vmul.f32 %v439, %v452
    %v456 = vmul.f32 %v440, %v454
    %v457 = vsub.f32 1.0, %v439
    %v458 = vsub.f32 1.0, %v440
    %v459 = vadd.f32 %v457, 1e-06
    %v460 = vadd.f32 %v458, 1e-06
    %v461 = vsub.f32 1.0, %v441
    %v462 = vsub.f32 1.0, %v442
    %v463 = vadd.f32 %v461, 1e-06
    %v464 = vadd.f32 %v462, 1e-06
    %v465 = vrcp.pop %v463
    %v466 = vmul.f32 %v459, %v465
    %v467 = vrcp.pop %v464
    %v468 = vmul.f32 %v460, %v467
    %v469 = vlog2.pop %v466
    %v470 = vmul.f32 %v469, 0.6931472
    %v471 = vlog2.pop %v468
    %v472 = vmul.f32 %v471, 0.6931472
    %v473 = vmul.f32 %v457, %v470
    %v474 = vmul.f32 %v458, %v472
    %v475 = vadd.f32 %v455, %v473
    %v476 = vadd.f32 %v456, %v474
    %v477 = vmul.f32 %v475, %v425
    %v478 = vmul.f32 %v476, %v426
    %vm479 = vcmask 64512
    %v480 = vsel %vm479, %v477, 0.0
    %v481 = vsel %vm479, %v478, 0.0
    %v482 = vadd.f32 %v480, %v481
    %483 = vadd.xlane.f32.xlu0 %v482
    %v484 = vpop.xlane.xlu0 %483
    %v485 = vrot.slane %v484, 4
    %v486 = vadd.f32 %v484, %v485
    %v487 = vrot.slane %v486, 2
    %v488 = vadd.f32 %v486, %v487
    %v489 = vrot.slane %v488, 1
    %v490 = vadd.f32 %v488, %v489
    %s491 = vtos %v490
    %v492 = vstv %s491
    %v493 = vmul.f32 %v492, 0.0078125
    %v495 = vsel %vm479, %v439, 0
    %497 = vmatprep.subr.mxu0 0.0
    %498 = vmatpush1.msra.mxu0 %v175
    %499 = vmatprep.subr.mxu0 0.0
    %500 = vmatpush1.msra.mxu0 0.0
    %501 = vmatprep.subr.mxu0 0.0
    %502 = vmatpush1.msra.mxu0 0.0
    %503 = vmatprep.subr.mxu0 0.0
    %504 = vmatpush1.msra.mxu0 0.0
    %505 = vmatprep.subr.mxu0 0.0
    %506 = vmatpush1.msra.mxu0 0.0
    %507 = vmatprep.subr.mxu0 0.0
    %508 = vmatpush1.msra.mxu0 0.0
    %509 = vmatprep.subr.mxu0 0.0
    %510 = vmatpush1.msra.mxu0 0.0
    %511 = vmatprep.subr.mxu0 0.0
    %512 = vmatpush1.msra.mxu0 0.0
    %513 = vmatprep.subr.mxu0 0.0
    %514 = vmatpush1.msra.mxu0 0.0
    %515 = vmatprep.subr.mxu0 0.0
    %516 = vmatpush1.msra.mxu0 0.0
    %517 = vmatprep.subr.mxu0 0.0
    %518 = vmatpush1.msra.mxu0 0.0
    %519 = vmatprep.subr.mxu0 0.0
    %520 = vmatpush1.msra.mxu0 0.0
    %521 = vmatprep.subr.mxu0 0.0
    %522 = vmatpush1.msra.mxu0 0.0
    %523 = vmatprep.subr.mxu0 0.0
    %524 = vmatpush1.msra.mxu0 0.0
    %525 = vmatprep.subr.mxu0 0.0
    %526 = vmatpush1.msra.mxu0 0.0
    %527 = vmatprep.subr.mxu0 0.0
    %528 = vmatpush1.msra.mxu0 0.0
    %529 = vmatprep.subr.mxu0 0.0
    %530 = vmatpush1.msra.mxu0 0.0
    %531 = vmatprep.subr.mxu0 0.0
    %532 = vmatpush1.msra.mxu0 0.0
    %533 = vmatprep.subr.mxu0 0.0
    %534 = vmatpush1.msra.mxu0 0.0
    %535 = vmatprep.subr.mxu0 0.0
    %536 = vmatpush1.msra.mxu0 0.0
    %537 = vmatprep.subr.mxu0 0.0
    %538 = vmatpush1.msra.mxu0 0.0
    %539 = vmatprep.subr.mxu0 0.0
    %540 = vmatpush1.msra.mxu0 0.0
    %541 = vmatprep.subr.mxu0 0.0
    %542 = vmatpush1.msra.mxu0 0.0
    %543 = vmatprep.subr.mxu0 0.0
    %544 = vmatpush1.msra.mxu0 0.0
    %545 = vmatprep.subr.mxu0 0.0
    %546 = vmatpush1.msra.mxu0 0.0
    %547 = vmatprep.subr.mxu0 0.0
    %548 = vmatpush1.msra.mxu0 0.0
    %549 = vmatprep.subr.mxu0 0.0
    %550 = vmatpush1.msra.mxu0 0.0
    %551 = vmatprep.subr.mxu0 0.0
    %552 = vmatpush1.msra.mxu0 0.0
    %553 = vmatprep.subr.mxu0 0.0
    %554 = vmatpush1.msra.mxu0 0.0
    %555 = vmatprep.subr.mxu0 0.0
    %556 = vmatpush1.msra.mxu0 0.0
    %557 = vmatprep.subr.mxu0 0.0
    %558 = vmatpush1.msra.mxu0 0.0
    %559 = vmatprep.subr.mxu0 0.0
    %560 = vmatpush1.msra.mxu0 0.0
    %561 = vmatprep.mubr.f32.mxu0 0.0
    %562 = vmatmul.mubr.f32.gmra.mrb[0].mxu0 %v495
    %v563 = vpop.f32.mrb[0].mxu0
    %v564 = vadd.f32 0.0, %v563
    %v565 = vpop.f32.mrb[0].mxu0
    %566 = vdwg.mxu0
    %v568 = vsel %vm479, %v440, 0
    %570 = vmatprep.subr.mxu0 0.0
    %571 = vmatpush1.msra.mxu0 %v180
    %572 = vmatprep.subr.mxu0 0.0
    %573 = vmatpush1.msra.mxu0 0.0
    %574 = vmatprep.subr.mxu0 0.0
    %575 = vmatpush1.msra.mxu0 0.0
    %576 = vmatprep.subr.mxu0 0.0
    %577 = vmatpush1.msra.mxu0 0.0
    %578 = vmatprep.subr.mxu0 0.0
    %579 = vmatpush1.msra.mxu0 0.0
    %580 = vmatprep.subr.mxu0 0.0
    %581 = vmatpush1.msra.mxu0 0.0
    %582 = vmatprep.subr.mxu0 0.0
    %583 = vmatpush1.msra.mxu0 0.0
    %584 = vmatprep.subr.mxu0 0.0
    %585 = vmatpush1.msra.mxu0 0.0
    %586 = vmatprep.subr.mxu0 0.0
    %587 = vmatpush1.msra.mxu0 0.0
    %588 = vmatprep.subr.mxu0 0.0
    %589 = vmatpush1.msra.mxu0 0.0
    %590 = vmatprep.subr.mxu0 0.0
    %591 = vmatpush1.msra.mxu0 0.0
    %592 = vmatprep.subr.mxu0 0.0
    %593 = vmatpush1.msra.mxu0 0.0
    %594 = vmatprep.subr.mxu0 0.0
    %595 = vmatpush1.msra.mxu0 0.0
    %596 = vmatprep.subr.mxu0 0.0
    %597 = vmatpush1.msra.mxu0 0.0
    %598 = vmatprep.subr.mxu0 0.0
    %599 = vmatpush1.msra.mxu0 0.0
    %600 = vmatprep.subr.mxu0 0.0
    %601 = vmatpush1.msra.mxu0 0.0
    %602 = vmatprep.subr.mxu0 0.0
    %603 = vmatpush1.msra.mxu0 0.0
    %604 = vmatprep.subr.mxu0 0.0
    %605 = vmatpush1.msra.mxu0 0.0
    %606 = vmatprep.subr.mxu0 0.0
    %607 = vmatpush1.msra.mxu0 0.0
    %608 = vmatprep.subr.mxu0 0.0
    %609 = vmatpush1.msra.mxu0 0.0
    %610 = vmatprep.subr.mxu0 0.0
    %611 = vmatpush1.msra.mxu0 0.0
    %612 = vmatprep.subr.mxu0 0.0
    %613 = vmatpush1.msra.mxu0 0.0
    %614 = vmatprep.subr.mxu0 0.0
    %615 = vmatpush1.msra.mxu0 0.0
    %616 = vmatprep.subr.mxu0 0.0
    %617 = vmatpush1.msra.mxu0 0.0
    %618 = vmatprep.subr.mxu0 0.0
    %619 = vmatpush1.msra.mxu0 0.0
    %620 = vmatprep.subr.mxu0 0.0
    %621 = vmatpush1.msra.mxu0 0.0
    %622 = vmatprep.subr.mxu0 0.0
    %623 = vmatpush1.msra.mxu0 0.0
    %624 = vmatprep.subr.mxu0 0.0
    %625 = vmatpush1.msra.mxu0 0.0
    %626 = vmatprep.subr.mxu0 0.0
    %627 = vmatpush1.msra.mxu0 0.0
    %628 = vmatprep.subr.mxu0 0.0
    %629 = vmatpush1.msra.mxu0 0.0
    %630 = vmatprep.subr.mxu0 0.0
    %631 = vmatpush1.msra.mxu0 0.0
    %632 = vmatprep.subr.mxu0 0.0
    %633 = vmatpush1.msra.mxu0 0.0
    %634 = vmatprep.mubr.f32.mxu0 0.0
    %635 = vmatmul.mubr.f32.gmra.mrb[0].mxu0 %v568
    %v636 = vpop.f32.mrb[0].mxu0
    %v637 = vadd.f32 0.0, %v636
    %v638 = vpop.f32.mrb[0].mxu0
    %639 = vdwg.mxu0
    %v640 = vld [vmem:[%s8] sm:$0xff]
    %v641 = vld [vmem:[%s8 + $0x8] sm:$0xff]
    %v642 = vld [vmem:[%s8 + $0x10] sm:$0xff]
    %v643 = vld [vmem:[%s8 + $0x18] sm:$0xff]
    %v645 = vsel %vm187, %v564, 0
    %v648 = vsel %vm187, %v637, 0
    %650 = vmatprep.subr.mxu0 0.0
    %651 = vmatpush1.msra.mxu0 %v640
    %652 = vmatprep.subr.mxu0 0.0
    %653 = vmatpush1.msra.mxu0 %v641
    %654 = vmatprep.subr.mxu0 0.0
    %655 = vmatpush1.msra.mxu0 %v642
    %656 = vmatprep.subr.mxu0 0.0
    %657 = vmatpush1.msra.mxu0 %v643
    %658 = vmatprep.subr.mxu0 0.0
    %659 = vmatpush1.msra.mxu0 0.0
    %660 = vmatprep.subr.mxu0 0.0
    %661 = vmatpush1.msra.mxu0 0.0
    %662 = vmatprep.subr.mxu0 0.0
    %663 = vmatpush1.msra.mxu0 0.0
    %664 = vmatprep.subr.mxu0 0.0
    %665 = vmatpush1.msra.mxu0 0.0
    %666 = vmatprep.subr.mxu0 0.0
    %667 = vmatpush1.msra.mxu0 0.0
    %668 = vmatprep.subr.mxu0 0.0
    %669 = vmatpush1.msra.mxu0 0.0
    %670 = vmatprep.subr.mxu0 0.0
    %671 = vmatpush1.msra.mxu0 0.0
    %672 = vmatprep.subr.mxu0 0.0
    %673 = vmatpush1.msra.mxu0 0.0
    %674 = vmatprep.subr.mxu0 0.0
    %675 = vmatpush1.msra.mxu0 0.0
    %676 = vmatprep.subr.mxu0 0.0
    %677 = vmatpush1.msra.mxu0 0.0
    %678 = vmatprep.subr.mxu0 0.0
    %679 = vmatpush1.msra.mxu0 0.0
    %680 = vmatprep.subr.mxu0 0.0
    %681 = vmatpush1.msra.mxu0 0.0
    %682 = vmatprep.subr.mxu0 0.0
    %683 = vmatpush1.msra.mxu0 0.0
    %684 = vmatprep.subr.mxu0 0.0
    %685 = vmatpush1.msra.mxu0 0.0
    %686 = vmatprep.subr.mxu0 0.0
    %687 = vmatpush1.msra.mxu0 0.0
    %688 = vmatprep.subr.mxu0 0.0
    %689 = vmatpush1.msra.mxu0 0.0
    %690 = vmatprep.subr.mxu0 0.0
    %691 = vmatpush1.msra.mxu0 0.0
    %692 = vmatprep.subr.mxu0 0.0
    %693 = vmatpush1.msra.mxu0 0.0
    %694 = vmatprep.subr.mxu0 0.0
    %695 = vmatpush1.msra.mxu0 0.0
    %696 = vmatprep.subr.mxu0 0.0
    %697 = vmatpush1.msra.mxu0 0.0
    %698 = vmatprep.subr.mxu0 0.0
    %699 = vmatpush1.msra.mxu0 0.0
    %700 = vmatprep.subr.mxu0 0.0
    %701 = vmatpush1.msra.mxu0 0.0
    %702 = vmatprep.subr.mxu0 0.0
    %703 = vmatpush1.msra.mxu0 0.0
    %704 = vmatprep.subr.mxu0 0.0
    %705 = vmatpush1.msra.mxu0 0.0
    %706 = vmatprep.subr.mxu0 0.0
    %707 = vmatpush1.msra.mxu0 0.0
    %708 = vmatprep.subr.mxu0 0.0
    %709 = vmatpush1.msra.mxu0 0.0
    %710 = vmatprep.subr.mxu0 0.0
    %711 = vmatpush1.msra.mxu0 0.0
    %712 = vmatprep.subr.mxu0 0.0
    %713 = vmatpush1.msra.mxu0 0.0
    %714 = vmatprep.mubr.f32.mxu0 0.0
    %715 = vmatmul.mubr.f32.gmra.mrb[0].mxu0 %v645
    %v716 = vpop.f32.mrb[0].mxu0
    %v717 = vadd.f32 0.0, %v716
    %v718 = vpop.f32.mrb[0].mxu0
    %719 = vmatprep.mubr.f32.mxu0 0.0
    %720 = vmatmul.mubr.f32.gmra.mrb[0].mxu0 %v648
    %v721 = vpop.f32.mrb[0].mxu0
    %v722 = vadd.f32 0.0, %v721
    %v723 = vpop.f32.mrb[0].mxu0
    %724 = vdwg.mxu0
    %v725 = vmax.f32 %v717, 0.0
    %v726 = vmax.f32 %v722, 0.0
    %v727 = vadd.f32 %v175, %v725
    %v728 = vadd.f32 %v180, %v726
    %v729 = vld [vmem:[%s9] sm:$0xff]
    %v730 = vld [vmem:[%s9 + $0x8] sm:$0xff]
    %v731 = vld [vmem:[%s9 + $0x10] sm:$0xff]
    %v732 = vld [vmem:[%s9 + $0x18] sm:$0xff]
    %v734 = vsel %vm187, %v727, 0
    %v737 = vsel %vm187, %v728, 0
    %739 = vmatprep.subr.mxu0 0.0
    %740 = vmatpush1.msra.mxu0 %v729
    %741 = vmatprep.subr.mxu0 0.0
    %742 = vmatpush1.msra.mxu0 %v730
    %743 = vmatprep.subr.mxu0 0.0
    %744 = vmatpush1.msra.mxu0 %v731
    %745 = vmatprep.subr.mxu0 0.0
    %746 = vmatpush1.msra.mxu0 %v732
    %747 = vmatprep.subr.mxu0 0.0
    %748 = vmatpush1.msra.mxu0 0.0
    %749 = vmatprep.subr.mxu0 0.0
    %750 = vmatpush1.msra.mxu0 0.0
    %751 = vmatprep.subr.mxu0 0.0
    %752 = vmatpush1.msra.mxu0 0.0
    %753 = vmatprep.subr.mxu0 0.0
    %754 = vmatpush1.msra.mxu0 0.0
    %755 = vmatprep.subr.mxu0 0.0
    %756 = vmatpush1.msra.mxu0 0.0
    %757 = vmatprep.subr.mxu0 0.0
    %758 = vmatpush1.msra.mxu0 0.0
    %759 = vmatprep.subr.mxu0 0.0
    %760 = vmatpush1.msra.mxu0 0.0
    %761 = vmatprep.subr.mxu0 0.0
    %762 = vmatpush1.msra.mxu0 0.0
    %763 = vmatprep.subr.mxu0 0.0
    %764 = vmatpush1.msra.mxu0 0.0
    %765 = vmatprep.subr.mxu0 0.0
    %766 = vmatpush1.msra.mxu0 0.0
    %767 = vmatprep.subr.mxu0 0.0
    %768 = vmatpush1.msra.mxu0 0.0
    %769 = vmatprep.subr.mxu0 0.0
    %770 = vmatpush1.msra.mxu0 0.0
    %771 = vmatprep.subr.mxu0 0.0
    %772 = vmatpush1.msra.mxu0 0.0
    %773 = vmatprep.subr.mxu0 0.0
    %774 = vmatpush1.msra.mxu0 0.0
    %775 = vmatprep.subr.mxu0 0.0
    %776 = vmatpush1.msra.mxu0 0.0
    %777 = vmatprep.subr.mxu0 0.0
    %778 = vmatpush1.msra.mxu0 0.0
    %779 = vmatprep.subr.mxu0 0.0
    %780 = vmatpush1.msra.mxu0 0.0
    %781 = vmatprep.subr.mxu0 0.0
    %782 = vmatpush1.msra.mxu0 0.0
    %783 = vmatprep.subr.mxu0 0.0
    %784 = vmatpush1.msra.mxu0 0.0
    %785 = vmatprep.subr.mxu0 0.0
    %786 = vmatpush1.msra.mxu0 0.0
    %787 = vmatprep.subr.mxu0 0.0
    %788 = vmatpush1.msra.mxu0 0.0
    %789 = vmatprep.subr.mxu0 0.0
    %790 = vmatpush1.msra.mxu0 0.0
    %791 = vmatprep.subr.mxu0 0.0
    %792 = vmatpush1.msra.mxu0 0.0
    %793 = vmatprep.subr.mxu0 0.0
    %794 = vmatpush1.msra.mxu0 0.0
    %795 = vmatprep.subr.mxu0 0.0
    %796 = vmatpush1.msra.mxu0 0.0
    %797 = vmatprep.subr.mxu0 0.0
    %798 = vmatpush1.msra.mxu0 0.0
    %799 = vmatprep.subr.mxu0 0.0
    %800 = vmatpush1.msra.mxu0 0.0
    %801 = vmatprep.subr.mxu0 0.0
    %802 = vmatpush1.msra.mxu0 0.0
    %803 = vmatprep.mubr.f32.mxu0 0.0
    %804 = vmatmul.mubr.f32.gmra.mrb[0].mxu0 %v734
    %v805 = vpop.f32.mrb[0].mxu0
    %v806 = vadd.f32 0.0, %v805
    %v807 = vpop.f32.mrb[0].mxu0
    %808 = vmatprep.mubr.f32.mxu0 0.0
    %809 = vmatmul.mubr.f32.gmra.mrb[0].mxu0 %v737
    %v810 = vpop.f32.mrb[0].mxu0
    %v811 = vadd.f32 0.0, %v810
    %v812 = vpop.f32.mrb[0].mxu0
    %813 = vdwg.mxu0
    %vm814 = vcmask 31744
    %v815 = vsel %vm814, %v806, -inf
    %816 = vmax.xlane.f32.xlu0 %v815
    %v817 = vpop.xlane.xlu0 %816
    %v818 = vsel %vm814, %v811, -inf
    %819 = vmax.xlane.f32.xlu0 %v818
    %v820 = vpop.xlane.xlu0 %819
    %v821 = vsub.f32 %v806, %v817
    %v822 = vsub.f32 %v811, %v820
    %v823 = vmul.f32 %v821, 1.442695
    %v824 = vpow.pop %v823
    %v825 = vmul.f32 %v822, 1.442695
    %v826 = vpow.pop %v825
    %v827 = vsel %vm814, %v824, 0.0
    %828 = vadd.xlane.f32.xlu0 %v827
    %v829 = vpop.xlane.xlu0 %828
    %v830 = vsel %vm814, %v826, 0.0
    %831 = vadd.xlane.f32.xlu0 %v830
    %v832 = vpop.xlane.xlu0 %831
    %v833 = vrcp.pop %v829
    %v834 = vmul.f32 %v824, %v833
    %v835 = vrcp.pop %v832
    %v836 = vmul.f32 %v826, %v835
    %838 = vset.pattern.permute.xlu0 0
    %839 = vperm.xlu0 %838, %v71
    %v840 = vpop.permute.xlu0 %839
    %843 = vset.pattern.permute.xlu0 0
    %844 = vperm.xlu0 %843, %v72
    %v845 = vpop.permute.xlu0 %844
    %v847 = vmul.f32 %v834, %v840
    %v848 = vmul.f32 %v836, %v845
    %849 = vxpose.xlu0.b32.start [1/16] %v847, 128
    %850 = vxpose.xlu0.b32.cont [2/16] 0.0, 128
    %851 = vxpose.xlu0.b32.cont [3/16] 0.0, 128
    %852 = vxpose.xlu0.b32.cont [4/16] 0.0, 128
    %853 = vxpose.xlu0.b32.cont [5/16] 0.0, 128
    %854 = vxpose.xlu0.b32.cont [6/16] 0.0, 128
    %855 = vxpose.xlu0.b32.cont [7/16] 0.0, 128
    %856 = vxpose.xlu0.b32.cont [8/16] 0.0, 128
    %857 = vxpose.xlu0.b32.cont [9/16] 0.0, 128
    %858 = vxpose.xlu0.b32.cont [10/16] 0.0, 128
    %859 = vxpose.xlu0.b32.cont [11/16] 0.0, 128
    %860 = vxpose.xlu0.b32.cont [12/16] 0.0, 128
    %861 = vxpose.xlu0.b32.cont [13/16] 0.0, 128
    %862 = vxpose.xlu0.b32.cont [14/16] 0.0, 128
    %863 = vxpose.xlu0.b32.cont [15/16] 0.0, 128
    %864 = vxpose.xlu0.b32.end [16/16] 0.0, 128
    %v865 = vpop.trf.xlu0
    %v866 = vpop.trf.xlu0
    %v867 = vpop.trf.xlu0
    %v868 = vpop.trf.xlu0
    %v869 = vpop.trf.xlu0
    %v870 = vpop.trf.xlu0
    %v871 = vpop.trf.xlu0
    %v872 = vpop.trf.xlu0
    %v873 = vpop.trf.xlu0
    %v874 = vpop.trf.xlu0
    %v875 = vpop.trf.xlu0
    %v876 = vpop.trf.xlu0
    %v877 = vpop.trf.xlu0
    %v878 = vpop.trf.xlu0
    %v879 = vpop.trf.xlu0
    %v880 = vpop.trf.xlu0
    %v882 = vsel %vm479, %v865, 0
    %884 = vmatprep.subr.mxu0 0.0
    %885 = vmatpush1.msra.mxu0 %v727
    %886 = vmatprep.subr.mxu0 0.0
    %887 = vmatpush1.msra.mxu0 0.0
    %888 = vmatprep.subr.mxu0 0.0
    %889 = vmatpush1.msra.mxu0 0.0
    %890 = vmatprep.subr.mxu0 0.0
    %891 = vmatpush1.msra.mxu0 0.0
    %892 = vmatprep.subr.mxu0 0.0
    %893 = vmatpush1.msra.mxu0 0.0
    %894 = vmatprep.subr.mxu0 0.0
    %895 = vmatpush1.msra.mxu0 0.0
    %896 = vmatprep.subr.mxu0 0.0
    %897 = vmatpush1.msra.mxu0 0.0
    %898 = vmatprep.subr.mxu0 0.0
    %899 = vmatpush1.msra.mxu0 0.0
    %900 = vmatprep.subr.mxu0 0.0
    %901 = vmatpush1.msra.mxu0 0.0
    %902 = vmatprep.subr.mxu0 0.0
    %903 = vmatpush1.msra.mxu0 0.0
    %904 = vmatprep.subr.mxu0 0.0
    %905 = vmatpush1.msra.mxu0 0.0
    %906 = vmatprep.subr.mxu0 0.0
    %907 = vmatpush1.msra.mxu0 0.0
    %908 = vmatprep.subr.mxu0 0.0
    %909 = vmatpush1.msra.mxu0 0.0
    %910 = vmatprep.subr.mxu0 0.0
    %911 = vmatpush1.msra.mxu0 0.0
    %912 = vmatprep.subr.mxu0 0.0
    %913 = vmatpush1.msra.mxu0 0.0
    %914 = vmatprep.subr.mxu0 0.0
    %915 = vmatpush1.msra.mxu0 0.0
    %916 = vmatprep.subr.mxu0 0.0
    %917 = vmatpush1.msra.mxu0 0.0
    %918 = vmatprep.subr.mxu0 0.0
    %919 = vmatpush1.msra.mxu0 0.0
    %920 = vmatprep.subr.mxu0 0.0
    %921 = vmatpush1.msra.mxu0 0.0
    %922 = vmatprep.subr.mxu0 0.0
    %923 = vmatpush1.msra.mxu0 0.0
    %924 = vmatprep.subr.mxu0 0.0
    %925 = vmatpush1.msra.mxu0 0.0
    %926 = vmatprep.subr.mxu0 0.0
    %927 = vmatpush1.msra.mxu0 0.0
    %928 = vmatprep.subr.mxu0 0.0
    %929 = vmatpush1.msra.mxu0 0.0
    %930 = vmatprep.subr.mxu0 0.0
    %931 = vmatpush1.msra.mxu0 0.0
    %932 = vmatprep.subr.mxu0 0.0
    %933 = vmatpush1.msra.mxu0 0.0
    %934 = vmatprep.subr.mxu0 0.0
    %935 = vmatpush1.msra.mxu0 0.0
    %936 = vmatprep.subr.mxu0 0.0
    %937 = vmatpush1.msra.mxu0 0.0
    %938 = vmatprep.subr.mxu0 0.0
    %939 = vmatpush1.msra.mxu0 0.0
    %940 = vmatprep.subr.mxu0 0.0
    %941 = vmatpush1.msra.mxu0 0.0
    %942 = vmatprep.subr.mxu0 0.0
    %943 = vmatpush1.msra.mxu0 0.0
    %944 = vmatprep.subr.mxu0 0.0
    %945 = vmatpush1.msra.mxu0 0.0
    %946 = vmatprep.subr.mxu0 0.0
    %947 = vmatpush1.msra.mxu0 0.0
    %948 = vmatprep.mubr.f32.mxu0 0.0
    %949 = vmatmul.mubr.f32.gmra.mrb[0].mxu0 %v882
    %v950 = vpop.f32.mrb[0].mxu0
    %v951 = vadd.f32 0.0, %v950
    %v952 = vpop.f32.mrb[0].mxu0
    %953 = vdwg.mxu0
    %954 = vxpose.xlu0.b32.start [1/16] %v848, 128
    %955 = vxpose.xlu0.b32.cont [2/16] 0.0, 128
    %956 = vxpose.xlu0.b32.cont [3/16] 0.0, 128
    %957 = vxpose.xlu0.b32.cont [4/16] 0.0, 128
    %958 = vxpose.xlu0.b32.cont [5/16] 0.0, 128
    %959 = vxpose.xlu0.b32.cont [6/16] 0.0, 128
    %960 = vxpose.xlu0.b32.cont [7/16] 0.0, 128
    %961 = vxpose.xlu0.b32.cont [8/16] 0.0, 128
    %962 = vxpose.xlu0.b32.cont [9/16] 0.0, 128
    %963 = vxpose.xlu0.b32.cont [10/16] 0.0, 128
    %964 = vxpose.xlu0.b32.cont [11/16] 0.0, 128
    %965 = vxpose.xlu0.b32.cont [12/16] 0.0, 128
    %966 = vxpose.xlu0.b32.cont [13/16] 0.0, 128
    %967 = vxpose.xlu0.b32.cont [14/16] 0.0, 128
    %968 = vxpose.xlu0.b32.cont [15/16] 0.0, 128
    %969 = vxpose.xlu0.b32.end [16/16] 0.0, 128
    %v970 = vpop.trf.xlu0
    %v971 = vpop.trf.xlu0
    %v972 = vpop.trf.xlu0
    %v973 = vpop.trf.xlu0
    %v974 = vpop.trf.xlu0
    %v975 = vpop.trf.xlu0
    %v976 = vpop.trf.xlu0
    %v977 = vpop.trf.xlu0
    %v978 = vpop.trf.xlu0
    %v979 = vpop.trf.xlu0
    %v980 = vpop.trf.xlu0
    %v981 = vpop.trf.xlu0
    %v982 = vpop.trf.xlu0
    %v983 = vpop.trf.xlu0
    %v984 = vpop.trf.xlu0
    %v985 = vpop.trf.xlu0
    %v987 = vsel %vm479, %v970, 0
    %989 = vmatprep.subr.mxu0 0.0
    %990 = vmatpush1.msra.mxu0 %v728
    %991 = vmatprep.subr.mxu0 0.0
    %992 = vmatpush1.msra.mxu0 0.0
    %993 = vmatprep.subr.mxu0 0.0
    %994 = vmatpush1.msra.mxu0 0.0
    %995 = vmatprep.subr.mxu0 0.0
    %996 = vmatpush1.msra.mxu0 0.0
    %997 = vmatprep.subr.mxu0 0.0
    %998 = vmatpush1.msra.mxu0 0.0
    %999 = vmatprep.subr.mxu0 0.0
    %1000 = vmatpush1.msra.mxu0 0.0
    %1001 = vmatprep.subr.mxu0 0.0
    %1002 = vmatpush1.msra.mxu0 0.0
    %1003 = vmatprep.subr.mxu0 0.0
    %1004 = vmatpush1.msra.mxu0 0.0
    %1005 = vmatprep.subr.mxu0 0.0
    %1006 = vmatpush1.msra.mxu0 0.0
    %1007 = vmatprep.subr.mxu0 0.0
    %1008 = vmatpush1.msra.mxu0 0.0
    %1009 = vmatprep.subr.mxu0 0.0
    %1010 = vmatpush1.msra.mxu0 0.0
    %1011 = vmatprep.subr.mxu0 0.0
    %1012 = vmatpush1.msra.mxu0 0.0
    %1013 = vmatprep.subr.mxu0 0.0
    %1014 = vmatpush1.msra.mxu0 0.0
    %1015 = vmatprep.subr.mxu0 0.0
    %1016 = vmatpush1.msra.mxu0 0.0
    %1017 = vmatprep.subr.mxu0 0.0
    %1018 = vmatpush1.msra.mxu0 0.0
    %1019 = vmatprep.subr.mxu0 0.0
    %1020 = vmatpush1.msra.mxu0 0.0
    %1021 = vmatprep.subr.mxu0 0.0
    %1022 = vmatpush1.msra.mxu0 0.0
    %1023 = vmatprep.subr.mxu0 0.0
    %1024 = vmatpush1.msra.mxu0 0.0
    %1025 = vmatprep.subr.mxu0 0.0
    %1026 = vmatpush1.msra.mxu0 0.0
    %1027 = vmatprep.subr.mxu0 0.0
    %1028 = vmatpush1.msra.mxu0 0.0
    %1029 = vmatprep.subr.mxu0 0.0
    %1030 = vmatpush1.msra.mxu0 0.0
    %1031 = vmatprep.subr.mxu0 0.0
    %1032 = vmatpush1.msra.mxu0 0.0
    %1033 = vmatprep.subr.mxu0 0.0
    %1034 = vmatpush1.msra.mxu0 0.0
    %1035 = vmatprep.subr.mxu0 0.0
    %1036 = vmatpush1.msra.mxu0 0.0
    %1037 = vmatprep.subr.mxu0 0.0
    %1038 = vmatpush1.msra.mxu0 0.0
    %1039 = vmatprep.subr.mxu0 0.0
    %1040 = vmatpush1.msra.mxu0 0.0
    %1041 = vmatprep.subr.mxu0 0.0
    %1042 = vmatpush1.msra.mxu0 0.0
    %1043 = vmatprep.subr.mxu0 0.0
    %1044 = vmatpush1.msra.mxu0 0.0
    %1045 = vmatprep.subr.mxu0 0.0
    %1046 = vmatpush1.msra.mxu0 0.0
    %1047 = vmatprep.subr.mxu0 0.0
    %1048 = vmatpush1.msra.mxu0 0.0
    %1049 = vmatprep.subr.mxu0 0.0
    %1050 = vmatpush1.msra.mxu0 0.0
    %1051 = vmatprep.subr.mxu0 0.0
    %1052 = vmatpush1.msra.mxu0 0.0
    %1053 = vmatprep.mubr.f32.mxu0 0.0
    %1054 = vmatmul.mubr.f32.gmra.mrb[0].mxu0 %v987
    %v1055 = vpop.f32.mrb[0].mxu0
    %v1056 = vadd.f32 0.0, %v1055
    %v1057 = vpop.f32.mrb[0].mxu0
    %1058 = vdwg.mxu0
    %v1060 = vsel %vm814, %v847, 0
    %1062 = vmatprep.subr.mxu0 0.0
    %1063 = vmatpush1.xpose.msra.mxu0 %v1060
    %1064 = vmatprep.subr.mxu0 0.0
    %1065 = vmatpush1.xpose.msra.mxu0 0.0
    %1066 = vmatprep.subr.mxu0 0.0
    %1067 = vmatpush1.xpose.msra.mxu0 0.0
    %1068 = vmatprep.subr.mxu0 0.0
    %1069 = vmatpush1.xpose.msra.mxu0 0.0
    %1070 = vmatprep.subr.mxu0 0.0
    %1071 = vmatpush1.xpose.msra.mxu0 0.0
    %1072 = vmatprep.subr.mxu0 0.0
    %1073 = vmatpush1.xpose.msra.mxu0 0.0
    %1074 = vmatprep.subr.mxu0 0.0
    %1075 = vmatpush1.xpose.msra.mxu0 0.0
    %1076 = vmatprep.subr.mxu0 0.0
    %1077 = vmatpush1.xpose.msra.mxu0 0.0
    %1078 = vmatprep.subr.mxu0 0.0
    %1079 = vmatpush1.xpose.msra.mxu0 0.0
    %1080 = vmatprep.subr.mxu0 0.0
    %1081 = vmatpush1.xpose.msra.mxu0 0.0
    %1082 = vmatprep.subr.mxu0 0.0
    %1083 = vmatpush1.xpose.msra.mxu0 0.0
    %1084 = vmatprep.subr.mxu0 0.0
    %1085 = vmatpush1.xpose.msra.mxu0 0.0
    %1086 = vmatprep.subr.mxu0 0.0
    %1087 = vmatpush1.xpose.msra.mxu0 0.0
    %1088 = vmatprep.subr.mxu0 0.0
    %1089 = vmatpush1.xpose.msra.mxu0 0.0
    %1090 = vmatprep.subr.mxu0 0.0
    %1091 = vmatpush1.xpose.msra.mxu0 0.0
    %1092 = vmatprep.subr.mxu0 0.0
    %1093 = vmatpush1.xpose.msra.mxu0 0.0
    %1094 = vmatprep.subr.mxu0 0.0
    %1095 = vmatpush1.xpose.msra.mxu0 0.0
    %1096 = vmatprep.subr.mxu0 0.0
    %1097 = vmatpush1.xpose.msra.mxu0 0.0
    %1098 = vmatprep.subr.mxu0 0.0
    %1099 = vmatpush1.xpose.msra.mxu0 0.0
    %1100 = vmatprep.subr.mxu0 0.0
    %1101 = vmatpush1.xpose.msra.mxu0 0.0
    %1102 = vmatprep.subr.mxu0 0.0
    %1103 = vmatpush1.xpose.msra.mxu0 0.0
    %1104 = vmatprep.subr.mxu0 0.0
    %1105 = vmatpush1.xpose.msra.mxu0 0.0
    %1106 = vmatprep.subr.mxu0 0.0
    %1107 = vmatpush1.xpose.msra.mxu0 0.0
    %1108 = vmatprep.subr.mxu0 0.0
    %1109 = vmatpush1.xpose.msra.mxu0 0.0
    %1110 = vmatprep.subr.mxu0 0.0
    %1111 = vmatpush1.xpose.msra.mxu0 0.0
    %1112 = vmatprep.subr.mxu0 0.0
    %1113 = vmatpush1.xpose.msra.mxu0 0.0
    %1114 = vmatprep.subr.mxu0 0.0
    %1115 = vmatpush1.xpose.msra.mxu0 0.0
    %1116 = vmatprep.subr.mxu0 0.0
    %1117 = vmatpush1.xpose.msra.mxu0 0.0
    %1118 = vmatprep.subr.mxu0 0.0
    %1119 = vmatpush1.xpose.msra.mxu0 0.0
    %1120 = vmatprep.subr.mxu0 0.0
    %1121 = vmatpush1.xpose.msra.mxu0 0.0
    %1122 = vmatprep.subr.mxu0 0.0
    %1123 = vmatpush1.xpose.msra.mxu0 0.0
    %1124 = vmatprep.subr.mxu0 0.0
    %1125 = vmatpush1.xpose.msra.mxu0 0.0
    %1126 = vmatprep.mubr.f32.mxu0 0.0
    %1127 = vmatmul.mubr.f32.gmra.mrb[0].mxu0 %v1060
    %v1128 = vpop.f32.mrb[0].mxu0
    %v1129 = vadd.f32 0.0, %v1128
    %v1130 = vpop.f32.mrb[0].mxu0
    %1131 = vdwg.mxu0
    %v1133 = vsel %vm814, %v848, 0
    %1135 = vmatprep.subr.mxu0 0.0
    %1136 = vmatpush1.xpose.msra.mxu0 %v1133
    %1137 = vmatprep.subr.mxu0 0.0
    %1138 = vmatpush1.xpose.msra.mxu0 0.0
    %1139 = vmatprep.subr.mxu0 0.0
    %1140 = vmatpush1.xpose.msra.mxu0 0.0
    %1141 = vmatprep.subr.mxu0 0.0
    %1142 = vmatpush1.xpose.msra.mxu0 0.0
    %1143 = vmatprep.subr.mxu0 0.0
    %1144 = vmatpush1.xpose.msra.mxu0 0.0
    %1145 = vmatprep.subr.mxu0 0.0
    %1146 = vmatpush1.xpose.msra.mxu0 0.0
    %1147 = vmatprep.subr.mxu0 0.0
    %1148 = vmatpush1.xpose.msra.mxu0 0.0
    %1149 = vmatprep.subr.mxu0 0.0
    %1150 = vmatpush1.xpose.msra.mxu0 0.0
    %1151 = vmatprep.subr.mxu0 0.0
    %1152 = vmatpush1.xpose.msra.mxu0 0.0
    %1153 = vmatprep.subr.mxu0 0.0
    %1154 = vmatpush1.xpose.msra.mxu0 0.0
    %1155 = vmatprep.subr.mxu0 0.0
    %1156 = vmatpush1.xpose.msra.mxu0 0.0
    %1157 = vmatprep.subr.mxu0 0.0
    %1158 = vmatpush1.xpose.msra.mxu0 0.0
    %1159 = vmatprep.subr.mxu0 0.0
    %1160 = vmatpush1.xpose.msra.mxu0 0.0
    %1161 = vmatprep.subr.mxu0 0.0
    %1162 = vmatpush1.xpose.msra.mxu0 0.0
    %1163 = vmatprep.subr.mxu0 0.0
    %1164 = vmatpush1.xpose.msra.mxu0 0.0
    %1165 = vmatprep.subr.mxu0 0.0
    %1166 = vmatpush1.xpose.msra.mxu0 0.0
    %1167 = vmatprep.subr.mxu0 0.0
    %1168 = vmatpush1.xpose.msra.mxu0 0.0
    %1169 = vmatprep.subr.mxu0 0.0
    %1170 = vmatpush1.xpose.msra.mxu0 0.0
    %1171 = vmatprep.subr.mxu0 0.0
    %1172 = vmatpush1.xpose.msra.mxu0 0.0
    %1173 = vmatprep.subr.mxu0 0.0
    %1174 = vmatpush1.xpose.msra.mxu0 0.0
    %1175 = vmatprep.subr.mxu0 0.0
    %1176 = vmatpush1.xpose.msra.mxu0 0.0
    %1177 = vmatprep.subr.mxu0 0.0
    %1178 = vmatpush1.xpose.msra.mxu0 0.0
    %1179 = vmatprep.subr.mxu0 0.0
    %1180 = vmatpush1.xpose.msra.mxu0 0.0
    %1181 = vmatprep.subr.mxu0 0.0
    %1182 = vmatpush1.xpose.msra.mxu0 0.0
    %1183 = vmatprep.subr.mxu0 0.0
    %1184 = vmatpush1.xpose.msra.mxu0 0.0
    %1185 = vmatprep.subr.mxu0 0.0
    %1186 = vmatpush1.xpose.msra.mxu0 0.0
    %1187 = vmatprep.subr.mxu0 0.0
    %1188 = vmatpush1.xpose.msra.mxu0 0.0
    %1189 = vmatprep.subr.mxu0 0.0
    %1190 = vmatpush1.xpose.msra.mxu0 0.0
    %1191 = vmatprep.subr.mxu0 0.0
    %1192 = vmatpush1.xpose.msra.mxu0 0.0
    %1193 = vmatprep.subr.mxu0 0.0
    %1194 = vmatpush1.xpose.msra.mxu0 0.0
    %1195 = vmatprep.subr.mxu0 0.0
    %1196 = vmatpush1.xpose.msra.mxu0 0.0
    %1197 = vmatprep.subr.mxu0 0.0
    %1198 = vmatpush1.xpose.msra.mxu0 0.0
    %1199 = vmatprep.mubr.f32.mxu0 0.0
    %1200 = vmatmul.mubr.f32.gmra.mrb[0].mxu0 %v1133
    %v1201 = vpop.f32.mrb[0].mxu0
    %v1202 = vadd.f32 0.0, %v1201
    %v1203 = vpop.f32.mrb[0].mxu0
    %1204 = vdwg.mxu0
    %v1205 = vsub.f32 %v439, %v1129
    %v1206 = vsub.f32 %v440, %v1202
    %v1207 = vmul.f32 %v1205, %v1205
    %v1208 = vmul.f32 %v1206, %v1206
    %v1209 = vsel %vm479, %v1207, 0.0
    %v1210 = vsel %vm479, %v1208, 0.0
    %v1211 = vadd.f32 %v1209, %v1210
    %1212 = vadd.xlane.f32.xlu0 %v1211
    %v1213 = vpop.xlane.xlu0 %1212
    %v1214 = vrot.slane %v1213, 4
    %v1215 = vadd.f32 %v1213, %v1214
    %v1216 = vrot.slane %v1215, 2
    %v1217 = vadd.f32 %v1215, %v1216
    %v1218 = vrot.slane %v1217, 1
    %v1219 = vadd.f32 %v1217, %v1218
    %s1220 = vtos %v1219
    %v1221 = vstv %s1220
    %v1222 = vmul.f32 %v1221, 0.0078125
    %v1223 = vsub.f32 0.0, %v847
    %v1224 = vsub.f32 0.0, %v848
    %v1225 = vadd.f32 %v847, 1e-06
    %v1226 = vadd.f32 %v848, 1e-06
    %v1227 = vlog2.pop %v1225
    %v1228 = vmul.f32 %v1227, 0.6931472
    %v1229 = vlog2.pop %v1226
    %v1230 = vmul.f32 %v1229, 0.6931472
    %v1231 = vmul.f32 %v1223, %v1228
    %v1232 = vmul.f32 %v1224, %v1230
    %v1233 = vsel %vm814, %v1231, 0.0
    %v1234 = vsel %vm814, %v1232, 0.0
    %v1235 = vadd.f32 %v1233, %v1234
    %1236 = vadd.xlane.f32.xlu0 %v1235
    %v1237 = vpop.xlane.xlu0 %1236
    %v1238 = vrot.slane %v1237, 4
    %v1239 = vadd.f32 %v1237, %v1238
    %v1240 = vrot.slane %v1239, 2
    %v1241 = vadd.f32 %v1239, %v1240
    %v1242 = vrot.slane %v1241, 1
    %v1243 = vadd.f32 %v1241, %v1242
    %s1244 = vtos %v1243
    %v1245 = vstv %s1244
    %v1246 = vmul.f32 %v1245, 0.015625
    %v1247 = vld [vmem:[%s10] sm:$0xff]
    %v1248 = vld [vmem:[%s10 + $0x8] sm:$0xff]
    %v1249 = vld [vmem:[%s10 + $0x10] sm:$0xff]
    %v1250 = vld [vmem:[%s10 + $0x18] sm:$0xff]
    %v1253 = vcombine.low %v951, %v1056
    %v1254 = vsel %vm187, %v1253, 0
    %1256 = vmatprep.subr.mxu0 0.0
    %1257 = vmatpush1.msra.mxu0 %v1247
    %1258 = vmatprep.subr.mxu0 0.0
    %1259 = vmatpush1.msra.mxu0 %v1248
    %1260 = vmatprep.subr.mxu0 0.0
    %1261 = vmatpush1.msra.mxu0 %v1249
    %1262 = vmatprep.subr.mxu0 0.0
    %1263 = vmatpush1.msra.mxu0 %v1250
    %1264 = vmatprep.subr.mxu0 0.0
    %1265 = vmatpush1.msra.mxu0 0.0
    %1266 = vmatprep.subr.mxu0 0.0
    %1267 = vmatpush1.msra.mxu0 0.0
    %1268 = vmatprep.subr.mxu0 0.0
    %1269 = vmatpush1.msra.mxu0 0.0
    %1270 = vmatprep.subr.mxu0 0.0
    %1271 = vmatpush1.msra.mxu0 0.0
    %1272 = vmatprep.subr.mxu0 0.0
    %1273 = vmatpush1.msra.mxu0 0.0
    %1274 = vmatprep.subr.mxu0 0.0
    %1275 = vmatpush1.msra.mxu0 0.0
    %1276 = vmatprep.subr.mxu0 0.0
    %1277 = vmatpush1.msra.mxu0 0.0
    %1278 = vmatprep.subr.mxu0 0.0
    %1279 = vmatpush1.msra.mxu0 0.0
    %1280 = vmatprep.subr.mxu0 0.0
    %1281 = vmatpush1.msra.mxu0 0.0
    %1282 = vmatprep.subr.mxu0 0.0
    %1283 = vmatpush1.msra.mxu0 0.0
    %1284 = vmatprep.subr.mxu0 0.0
    %1285 = vmatpush1.msra.mxu0 0.0
    %1286 = vmatprep.subr.mxu0 0.0
    %1287 = vmatpush1.msra.mxu0 0.0
    %1288 = vmatprep.subr.mxu0 0.0
    %1289 = vmatpush1.msra.mxu0 0.0
    %1290 = vmatprep.subr.mxu0 0.0
    %1291 = vmatpush1.msra.mxu0 0.0
    %1292 = vmatprep.subr.mxu0 0.0
    %1293 = vmatpush1.msra.mxu0 0.0
    %1294 = vmatprep.subr.mxu0 0.0
    %1295 = vmatpush1.msra.mxu0 0.0
    %1296 = vmatprep.subr.mxu0 0.0
    %1297 = vmatpush1.msra.mxu0 0.0
    %1298 = vmatprep.subr.mxu0 0.0
    %1299 = vmatpush1.msra.mxu0 0.0
    %1300 = vmatprep.subr.mxu0 0.0
    %1301 = vmatpush1.msra.mxu0 0.0
    %1302 = vmatprep.subr.mxu0 0.0
    %1303 = vmatpush1.msra.mxu0 0.0
    %1304 = vmatprep.subr.mxu0 0.0
    %1305 = vmatpush1.msra.mxu0 0.0
    %1306 = vmatprep.subr.mxu0 0.0
    %1307 = vmatpush1.msra.mxu0 0.0
    %1308 = vmatprep.subr.mxu0 0.0
    %1309 = vmatpush1.msra.mxu0 0.0
    %1310 = vmatprep.subr.mxu0 0.0
    %1311 = vmatpush1.msra.mxu0 0.0
    %1312 = vmatprep.subr.mxu0 0.0
    %1313 = vmatpush1.msra.mxu0 0.0
    %1314 = vmatprep.subr.mxu0 0.0
    %1315 = vmatpush1.msra.mxu0 0.0
    %1316 = vmatprep.subr.mxu0 0.0
    %1317 = vmatpush1.msra.mxu0 0.0
    %1318 = vmatprep.subr.mxu0 0.0
    %1319 = vmatpush1.msra.mxu0 0.0
    %1320 = vmatprep.mubr.f32.mxu0 0.0
    %1321 = vmatmul.mubr.f32.gmra.mrb[0].mxu0 %v1254
    %v1322 = vpop.f32.mrb[0].mxu0
    %v1323 = vadd.f32 0.0, %v1322
    %v1324 = vpop.f32.mrb[0].mxu0
    %1325 = vdwg.mxu0
    %v1326 = vtanh.pop %v1323
    %v1327 = vlaneseq
    %v1328 = vshrl.u32 %v1327, 7
    %v1329 = vsub.s32 0, %v1328
    %v1330 = vrot.slane %v44, %v1329
    %v1331 = vmul.f32 %v1326, %v1330
    %v1332 = vsel %vm187, %v1331, 0.0
    %1333 = vadd.xlane.f32.xlu0 %v1332
    %v1334 = vpop.xlane.xlu0 %1333
    %v1337 = vunpack.c.l.s4 839922192
    %v1338 = vunpack.c.0.s8 %v1337
    %v1339 = vlaneseq
    %v1340 = vshrl.u32 %v1339, 7
    %v1341 = vsub.s32 %v1338, %v1340
    %v1342 = vrot.slane %v1334, %v1341
    %v1344 = vunpack.c.l.s4 1985246804
    %v1345 = vunpack.c.0.s8 %v1344
    %v1346 = vlaneseq
    %v1347 = vshrl.u32 %v1346, 7
    %v1348 = vsub.s32 %v1345, %v1347
    %v1349 = vrot.slane %v1334, %v1348
    %vm1352 = vcmask 1043456
    %v1353 = vsel %vm1352, %v1342, -inf
    %v1354 = vrot.slane %v1353, 4
    %v1355 = vmax.f32 %v1353, %v1354
    %v1356 = vrot.slane %v1355, 2
    %v1357 = vmax.f32 %v1355, %v1356
    %v1358 = vrot.slane %v1357, 1
    %v1359 = vmax.f32 %v1357, %v1358
    %v1360 = vsel %vm1352, %v1349, -inf
    %v1361 = vrot.slane %v1360, 4
    %v1362 = vmax.f32 %v1360, %v1361
    %v1363 = vrot.slane %v1362, 2
    %v1364 = vmax.f32 %v1362, %v1363
    %v1365 = vrot.slane %v1364, 1
    %v1366 = vmax.f32 %v1364, %v1365
    %v1367 = vsub.f32 %v1342, %v1359
    %v1368 = vsub.f32 %v1349, %v1366
    %v1369 = vmul.f32 %v1367, 1.442695
    %v1370 = vpow.pop %v1369
    %v1371 = vmul.f32 %v1368, 1.442695
    %v1372 = vpow.pop %v1371
    %v1373 = vsel %vm1352, %v1370, 0.0
    %v1374 = vrot.slane %v1373, 4
    %v1375 = vadd.f32 %v1373, %v1374
    %v1376 = vrot.slane %v1375, 2
    %v1377 = vadd.f32 %v1375, %v1376
    %v1378 = vrot.slane %v1377, 1
    %v1379 = vadd.f32 %v1377, %v1378
    %v1380 = vsel %vm1352, %v1372, 0.0
    %v1381 = vrot.slane %v1380, 4
    %v1382 = vadd.f32 %v1380, %v1381
    %v1383 = vrot.slane %v1382, 2
    %v1384 = vadd.f32 %v1382, %v1383
    %v1385 = vrot.slane %v1384, 1
    %v1386 = vadd.f32 %v1384, %v1385
    %v1387 = vrcp.pop %v1379
    %v1388 = vmul.f32 %v1370, %v1387
    %v1389 = vrcp.pop %v1386
    %v1390 = vmul.f32 %v1372, %v1389
    %v1391 = vmul.f32 %v1388, %v951
    %v1392 = vmul.f32 %v1390, %v1056
    %vm1393 = vcmask 257024
    %v1394 = vsel %vm1393, %v1391, 0.0
    %v1395 = vrot.slane %v1394, 4
    %v1396 = vadd.f32 %v1394, %v1395
    %v1397 = vrot.slane %v1396, 2
    %v1398 = vadd.f32 %v1396, %v1397
    %v1399 = vrot.slane %v1398, 1
    %v1400 = vadd.f32 %v1398, %v1399
    %v1401 = vsel %vm1393, %v1392, 0.0
    %v1402 = vrot.slane %v1401, 4
    %v1403 = vadd.f32 %v1401, %v1402
    %v1404 = vrot.slane %v1403, 2
    %v1405 = vadd.f32 %v1403, %v1404
    %v1406 = vrot.slane %v1405, 1
    %v1407 = vadd.f32 %v1405, %v1406
    %v1408 = vld [vmem:[%s11] sm:$0xff]
    %v1409 = vld [vmem:[%s11 + $0x8] sm:$0xff]
    %v1410 = vld [vmem:[%s11 + $0x10] sm:$0xff]
    %v1411 = vld [vmem:[%s11 + $0x18] sm:$0xff]
    %v1412 = vlaneseq
    %v1413 = vshrl.u32 %v1412, 7
    %v1414 = vsub.s32 0, %v1413
    %v1415 = vrot.slane %v45, %v1414
    %vm1418 = vcmask 1041409
    %v1419 = vsel %vm1418, %v1407, %v1400
    %v1420 = vsel %vm187, %v1419, 0
    %1422 = vmatprep.subr.mxu0 0.0
    %1423 = vmatpush1.msra.mxu0 %v1408
    %1424 = vmatprep.subr.mxu0 0.0
    %1425 = vmatpush1.msra.mxu0 %v1409
    %1426 = vmatprep.subr.mxu0 0.0
    %1427 = vmatpush1.msra.mxu0 %v1410
    %1428 = vmatprep.subr.mxu0 0.0
    %1429 = vmatpush1.msra.mxu0 %v1411
    %1430 = vmatprep.subr.mxu0 0.0
    %1431 = vmatpush1.msra.mxu0 0.0
    %1432 = vmatprep.subr.mxu0 0.0
    %1433 = vmatpush1.msra.mxu0 0.0
    %1434 = vmatprep.subr.mxu0 0.0
    %1435 = vmatpush1.msra.mxu0 0.0
    %1436 = vmatprep.subr.mxu0 0.0
    %1437 = vmatpush1.msra.mxu0 0.0
    %1438 = vmatprep.subr.mxu0 0.0
    %1439 = vmatpush1.msra.mxu0 0.0
    %1440 = vmatprep.subr.mxu0 0.0
    %1441 = vmatpush1.msra.mxu0 0.0
    %1442 = vmatprep.subr.mxu0 0.0
    %1443 = vmatpush1.msra.mxu0 0.0
    %1444 = vmatprep.subr.mxu0 0.0
    %1445 = vmatpush1.msra.mxu0 0.0
    %1446 = vmatprep.subr.mxu0 0.0
    %1447 = vmatpush1.msra.mxu0 0.0
    %1448 = vmatprep.subr.mxu0 0.0
    %1449 = vmatpush1.msra.mxu0 0.0
    %1450 = vmatprep.subr.mxu0 0.0
    %1451 = vmatpush1.msra.mxu0 0.0
    %1452 = vmatprep.subr.mxu0 0.0
    %1453 = vmatpush1.msra.mxu0 0.0
    %1454 = vmatprep.subr.mxu0 0.0
    %1455 = vmatpush1.msra.mxu0 0.0
    %1456 = vmatprep.subr.mxu0 0.0
    %1457 = vmatpush1.msra.mxu0 0.0
    %1458 = vmatprep.subr.mxu0 0.0
    %1459 = vmatpush1.msra.mxu0 0.0
    %1460 = vmatprep.subr.mxu0 0.0
    %1461 = vmatpush1.msra.mxu0 0.0
    %1462 = vmatprep.subr.mxu0 0.0
    %1463 = vmatpush1.msra.mxu0 0.0
    %1464 = vmatprep.subr.mxu0 0.0
    %1465 = vmatpush1.msra.mxu0 0.0
    %1466 = vmatprep.subr.mxu0 0.0
    %1467 = vmatpush1.msra.mxu0 0.0
    %1468 = vmatprep.subr.mxu0 0.0
    %1469 = vmatpush1.msra.mxu0 0.0
    %1470 = vmatprep.subr.mxu0 0.0
    %1471 = vmatpush1.msra.mxu0 0.0
    %1472 = vmatprep.subr.mxu0 0.0
    %1473 = vmatpush1.msra.mxu0 0.0
    %1474 = vmatprep.subr.mxu0 0.0
    %1475 = vmatpush1.msra.mxu0 0.0
    %1476 = vmatprep.subr.mxu0 0.0
    %1477 = vmatpush1.msra.mxu0 0.0
    %1478 = vmatprep.subr.mxu0 0.0
    %1479 = vmatpush1.msra.mxu0 0.0
    %1480 = vmatprep.subr.mxu0 0.0
    %1481 = vmatpush1.msra.mxu0 0.0
    %1482 = vmatprep.subr.mxu0 0.0
    %1483 = vmatpush1.msra.mxu0 0.0
    %1484 = vmatprep.subr.mxu0 0.0
    %1485 = vmatpush1.msra.mxu0 0.0
    %1486 = vmatprep.mubr.f32.mxu0 0.0
    %1487 = vmatmul.mubr.f32.gmra.mrb[0].mxu0 %v1420
    %v1488 = vpop.f32.mrb[0].mxu0
    %v1489 = vadd.f32 %v1415, %v1488
    %v1490 = vpop.f32.mrb[0].mxu0
    %1491 = vdwg.mxu0
    %vm1492 = vcmask 33792
    %v1493 = vsel %vm1492, %v1489, -inf
    %1494 = vmax.xlane.f32.xlu0 %v1493
    %v1495 = vpop.xlane.xlu0 %1494
    %v1496 = vsub.f32 %v1489, %v1495
    %v1497 = vmul.f32 %v1496, 1.442695
    %v1498 = vpow.pop %v1497
    %v1499 = vsel %vm1492, %v1498, 0.0
    %1500 = vadd.xlane.f32.xlu0 %v1499
    %v1501 = vpop.xlane.xlu0 %1500
    %v1502 = vlog2.pop %v1501
    %v1503 = vmul.f32 %v1502, 0.6931472
    %v1504 = vsub.f32 %v1496, %v1503
    %1505 = vst [vmem:[#allocation2] sm:$0xff] 0.0
    %1506 = vst [vmem:[#allocation2 + $0x8] sm:$0xff] 0.0
    %1507 = vst.msk [vmem:[#allocation2] sm:$0xff] %vm479, %v439
    %1508 = vst.msk [vmem:[#allocation2 + $0x8] sm:$0xff] %vm479, %v440
    %1509 = vrot.lane.b32.xlu0 %v847, 8
    %v1510 = vpop.permute.xlu0 %1509
    %1511 = vrot.lane.b32.xlu0 %v848, 8
    %v1512 = vpop.permute.xlu0 %1511
    %vm1515 = vcmask 97344
    %1516 = vst.msk [vmem:[#allocation2] sm:$0xff] %vm1515, %v1510
    %1517 = vst.msk [vmem:[#allocation2 + $0x8] sm:$0xff] %vm1515, %v1512
    %v1520 = vcombine.low %v1388, %v1390
    %1521 = vrot.lane.b32.xlu0 %v1520, 16
    %v1522 = vpop.permute.xlu0 %1521
    %vm1524 = vcmask 138368
    %1525 = vst.msk [vmem:[#allocation2] sm:$0xff] %vm1524, %v1522
    %1527 = vrot.lane.b32.xlu0 %v1504, 24
    %v1528 = vpop.permute.xlu0 %1527
    %vm1530 = vcmask 230592
    %1531 = vst.msk [vmem:[#allocation2] sm:$0x3] %vm1530, %v1528
    %vm1532 = vcmask 262400
    %1533 = vst.msk [vmem:[#allocation2] sm:$0x1] %vm1532, %v493
    %vm1534 = vcmask 270600
    %1535 = vst.msk [vmem:[#allocation2] sm:$0x1] %vm1534, %v1222
    %vm1536 = vcmask 278800
    %1537 = vst.msk [vmem:[#allocation2] sm:$0x1] %vm1536, %v1246
    // Predicated region
    $region50: #{tpu_custom_call.1} parent=1 // pred_check
      _
    $region51: #{tpu_custom_call.1} parent=1 // pred_check_branch
      %1539 = sbr.rel (0) target = $region53
    $region52: #{tpu_custom_call.1} parent=1 // pred_region
      %s1541 = ssub.s32 256, 256
      %1542 = vsyncadd [#allocation3], %s1541
      %s1543 = sshll.u32 [#allocation2], 4
      %s1544 = int_to_ptr.vmem [resolvable:$true] %s1543
      %1549 = dma.vmem_to_hbm [thread:$0]  %s1544, 256, %s12, [#allocation3], 128, 128, 8
    $region53: #{tpu_custom_call.1} parent=1 // pred_fallthru
      _
    // Predicated region
    $region54: #{tpu_custom_call.1} parent=1 // pred_check
      _
    $region55: #{tpu_custom_call.1} parent=1 // pred_check_branch
      %1551 = sbr.rel (0) target = $region57
    $region56: #{tpu_custom_call.1} parent=1 // pred_region
      %1552 = dma.done [#allocation3], 256
    $region57: #{tpu_custom_call.1} parent=1 // pred_fallthru
      _
    %1553 = vsyncpa [#allocation3], 1

</llo_original>
